<compile_context>
chip_gen: v6e
topology: v6e:2x2x1
jax: 0.10.0
libtpu: 0.0.40
codegen_flags: <defaults>
</compile_context>

<pallas_src>
from typing import NamedTuple

import jax
import jax.numpy as jnp
import numpy as np
from jax.experimental import pallas as pl
from jax.experimental.pallas import tpu as pltpu


class EncoderContext(NamedTuple):
    decoder_hidden: jax.Array
    decoder_input_concat: jax.Array
    decoder_hidden_concat: jax.Array


# --------------------------------------------------------------------------
# Fused kernel: counters Linear+ReLU  +  embedding-folded GRU
# --------------------------------------------------------------------------
def _fused_encoder_kernel(cx_ref, cw_ref, cb_ref,
                          tok_ref, eproj_ref, bi_ref, wh_ref, bhn_ref,
                          cenc_ref, h_ref):
    # ---- Branch 1: block-region counters Linear + ReLU --------------------
    cenc_ref[...] = jnp.maximum(
        jnp.dot(cx_ref[...], cw_ref[...], preferred_element_type=jnp.float32)
        + cb_ref[...], 0.0)

    # ---- Branch 2: previous-utterances GRU ---------------------------------
    B, H = h_ref.shape
    SB = tok_ref.shape[0]          # S * B (time-major flattening)
    S = SB // B
    V = eproj_ref.shape[0]

    # Embedding lookup + input projection for ALL timesteps at once:
    #   one_hot(tokens) @ (embedding @ [Wir|Wiz|Win])  + fused input biases
    tok = tok_ref[...]                                              # (S*B, 1)
    onehot = (tok == jax.lax.broadcasted_iota(jnp.int32, (SB, V), 1)
              ).astype(jnp.float32)                                 # (S*B, V)
    xproj = (jnp.dot(onehot, eproj_ref[...],
                     preferred_element_type=jnp.float32)
             + bi_ref[...])                                         # (S*B, 3H)

    wh = wh_ref[...]                                                # (H, 3H)
    bhn = bhn_ref[...]                                              # (1, H)

    # TODO(synk): pack_padded_sequence / variable utterance lengths, dropout,
    # multi-layer and bidirectional RNN variants are not modeled (all sequences
    # assumed full length, single unidirectional layer, eval mode).
    h = jnp.zeros((B, H), jnp.float32)
    for t in range(S):  # S is static & tiny -> fully unrolled recurrence
        xp = xproj[t * B:(t + 1) * B, :]                            # (B, 3H)
        hp = jnp.dot(h, wh, preferred_element_type=jnp.float32)     # (B, 3H)
        r = jax.nn.sigmoid(xp[:, 0:H] + hp[:, 0:H])
        z = jax.nn.sigmoid(xp[:, H:2 * H] + hp[:, H:2 * H])
        n = jnp.tanh(xp[:, 2 * H:3 * H] + r * (hp[:, 2 * H:3 * H] + bhn))
        h = (1.0 - z) * n + z * h
    h_ref[...] = h


def _fused_encoder_call(x_pad, cw, cb, tok, eproj, bi, wh, bhn):
    B, Fp = x_pad.shape
    C = cw.shape[1]
    H = wh.shape[0]
    SB = tok.shape[0]
    S = SB // B
    V = eproj.shape[0]

    flops = (2 * B * Fp * C                 # counters linear
             + 2 * SB * V * 3 * H           # one-hot @ E_proj
             + 2 * S * B * H * 3 * H        # recurrent matmuls
             + 12 * SB * H)                 # gate elementwise
    transcendentals = 3 * SB * H            # 2 sigmoid + 1 tanh per step/elem
    bytes_accessed = 4 * (x_pad.size + cw.size + cb.size + tok.size
                          + eproj.size + bi.size + wh.size + bhn.size
                          + B * C + B * H)

    vmem = pl.BlockSpec(memory_space=pltpu.MemorySpace.VMEM)
    return pl.pallas_call(
        _fused_encoder_kernel,
        out_shape=(jax.ShapeDtypeStruct((B, C), jnp.float32),
                   jax.ShapeDtypeStruct((B, H), jnp.float32)),
        in_specs=[vmem] * 8,
        out_specs=(vmem, vmem),
        cost_estimate=pl.CostEstimate(flops=flops,
                                      transcendentals=transcendentals,
                                      bytes_accessed=bytes_accessed),
    )(x_pad, cw, cb, tok, eproj, bi, wh, bhn)


# --------------------------------------------------------------------------
# Integrated encoder (matches the PyTorch module's forward semantics)
# --------------------------------------------------------------------------
@jax.jit
def utterances_and_block_region_counters_encode(block_counters, tokens, fused):
    B, F = block_counters.shape
    S = tokens.shape[1]
    Fp = fused["counter_w"].shape[0]

    # Zero-pad counter features to the lane-aligned width used by the weights.
    x = block_counters
    if Fp != F:
        x = jnp.pad(x, ((0, 0), (0, Fp - F)))

    # Time-major flatten of tokens: row index = t*B + b (tiny int32 reshape).
    tok_tm = jnp.transpose(tokens, (1, 0)).reshape(S * B, 1).astype(jnp.int32)

    counters_enc, h = _fused_encoder_call(
        x, fused["counter_w"], fused["counter_b"],
        tok_tm, fused["eproj"], fused["bi"], fused["wh"], fused["bhn"])

    rnn_hidden = h[None, :, :]   # (num_layers*dirs=1, B, H)
    return EncoderContext(
        decoder_hidden=rnn_hidden,
        decoder_input_concat=counters_enc,
        decoder_hidden_concat=counters_enc,
    )


# --------------------------------------------------------------------------
# Parameter construction + offline folding
# --------------------------------------------------------------------------
def make_params(key, input_size, counter_embedding_size, vocab_size,
                embed_dim, hidden_size):
    ks = jax.random.split(key, 16)
    s = 0.05

    def rnd(k, shape):
        return jax.random.normal(k, shape, jnp.float32) * s

    gru = {
        "wir": rnd(ks[0], (embed_dim, hidden_size)),
        "wiz": rnd(ks[1], (embed_dim, hidden_size)),
        "win": rnd(ks[2], (embed_dim, hidden_size)),
        "whr": rnd(ks[3], (hidden_size, hidden_size)),
        "whz": rnd(ks[4], (hidden_size, hidden_size)),
        "whn": rnd(ks[5], (hidden_size, hidden_size)),
        "bir": rnd(ks[6], (1, hidden_size)),
        "biz": rnd(ks[7], (1, hidden_size)),
        "bin": rnd(ks[8], (1, hidden_size)),
        "bhr": rnd(ks[9], (1, hidden_size)),
        "bhz": rnd(ks[10], (1, hidden_size)),
        "bhn": rnd(ks[11], (1, hidden_size)),
    }
    return {
        "counter_w": rnd(ks[12], (input_size, counter_embedding_size)),
        "counter_b": rnd(ks[13], (1, counter_embedding_size)),
        "embedding": rnd(ks[14], (vocab_size, embed_dim)),
        "gru": gru,
    }


def fold_params(params, padded_input_size):
    """One-time offline folding: gate concat, bias fuse, embedding @ W_i."""
    g = params["gru"]
    wi = jnp.concatenate([g["wir"], g["wiz"], g["win"]], axis=1)   # (E, 3H)
    wh = jnp.concatenate([g["whr"], g["whz"], g["whn"]], axis=1)   # (H, 3H)
    eproj = params["embedding"] @ wi                               # (V, 3H)
    bi = jnp.concatenate([g["bir"] + g["bhr"],
                          g["biz"] + g["bhz"],
                          g["bin"]], axis=1)                       # (1, 3H)
    cw = params["counter_w"]
    F = cw.shape[0]
    if padded_input_size > F:
        cw = jnp.pad(cw, ((0, padded_input_size - F), (0, 0)))     # zero rows
    return {
        "counter_w": cw,
        "counter_b": params["counter_b"],
        "eproj": eproj,
        "bi": bi,
        "wh": wh,
        "bhn": g["bhn"],
    }


# --------------------------------------------------------------------------
# Plain-JAX reference (unfused, gather-based) for correctness checking
# --------------------------------------------------------------------------
def _reference_forward(block_counters, tokens, raw):
    cenc = jax.nn.relu(block_counters @ raw["counter_w"] + raw["counter_b"])
    emb = raw["embedding"][tokens]            # (B, S, E)
    g = raw["gru"]
    B, S, _ = emb.shape
    H = g["whr"].shape[0]
    h = jnp.zeros((B, H), jnp.float32)
    for t in range(S):
        xt = emb[:, t, :]
        r = jax.nn.sigmoid(xt @ g["wir"] + g["bir"] + h @ g["whr"] + g["bhr"])
        z = jax.nn.sigmoid(xt @ g["wiz"] + g["biz"] + h @ g["whz"] + g["bhz"])
        n = jnp.tanh(xt @ g["win"] + g["bin"] + r * (h @ g["whn"] + g["bhn"]))
        h = (1.0 - z) * n + z * h
    return cenc, h[None, :, :]


if __name__ == "__main__":
    # Args implied by the module: use_existing_blocks_counter=False -> 18 per
    # region; spatial_info_window_size=1 -> 27 regions; +1 extra feature.
    INPUT_SIZE_PER_REGION = 18
    NUM_REGIONS = 27
    COUNTER_INPUT_SIZE = INPUT_SIZE_PER_REGION * NUM_REGIONS + 1  # 487
    COUNTER_EMBED = 32
    VOCAB = 50
    EMBED_DIM = 32
    HIDDEN = 32
    BATCH = 2
    SEQ = 8

    key = jax.random.PRNGKey(0)
    k_params, k_counters, k_tokens = jax.random.split(key, 3)

    raw_params = make_params(k_params, COUNTER_INPUT_SIZE, COUNTER_EMBED,
                             VOCAB, EMBED_DIM, HIDDEN)
    padded_f = ((COUNTER_INPUT_SIZE + 127) // 128) * 128            # 512
    fused_params = fold_params(raw_params, padded_f)

    block_counters = jax.random.uniform(
        k_counters, (BATCH, COUNTER_INPUT_SIZE), jnp.float32)
    tokens = jax.random.randint(
        k_tokens, (BATCH, SEQ), 0, VOCAB, jnp.int32)

    out = utterances_and_block_region_counters_encode(
        block_counters, tokens, fused_params)
    jax.block_until_ready(out)

    assert out.decoder_hidden.shape == (1, BATCH, HIDDEN)
    assert out.decoder_input_concat.shape == (BATCH, COUNTER_EMBED)
    assert out.decoder_hidden_concat.shape == (BATCH, COUNTER_EMBED)

    # Numerical check against the unfused plain-JAX reference.
    ref_cenc, ref_h = _reference_forward(block_counters, tokens, raw_params)
    assert np.allclose(np.asarray(out.decoder_input_concat),
                       np.asarray(ref_cenc), atol=2e-3, rtol=2e-3)
    assert np.allclose(np.asarray(out.decoder_hidden),
                       np.asarray(ref_h), atol=2e-3, rtol=2e-3)

    print("KERNEL_OK")
</pallas_src>

<mosaic_0001>
module attributes {stable_mosaic.version = 11 : i64} {
  func.func @_fused_encoder_kernel(%arg0: memref<2x512xf32, #tpu.memory_space<vmem>>, %arg1: memref<512x32xf32, #tpu.memory_space<vmem>>, %arg2: memref<1x32xf32, #tpu.memory_space<vmem>>, %arg3: memref<16x1xi32, #tpu.memory_space<vmem>>, %arg4: memref<50x96xf32, #tpu.memory_space<vmem>>, %arg5: memref<1x96xf32, #tpu.memory_space<vmem>>, %arg6: memref<32x96xf32, #tpu.memory_space<vmem>>, %arg7: memref<1x32xf32, #tpu.memory_space<vmem>>, %arg8: memref<2x32xf32, #tpu.memory_space<vmem>>, %arg9: memref<2x32xf32, #tpu.memory_space<vmem>>) attributes {dimension_semantics = [], scalar_prefetch = 0 : i64, scratch_operands = 0 : i64, tpu.core_type = #tpu.core_type<tc>} {
    %c0 = arith.constant 0 : index
    %c0_0 = arith.constant 0 : index
    %0 = vector.load %arg0[%c0, %c0_0] : memref<2x512xf32, #tpu.memory_space<vmem>>, vector<2x512xf32>
    %c0_1 = arith.constant 0 : index
    %c0_2 = arith.constant 0 : index
    %1 = vector.load %arg1[%c0_1, %c0_2] : memref<512x32xf32, #tpu.memory_space<vmem>>, vector<512x32xf32>
    %cst = arith.constant dense<0.000000e+00> : vector<2x32xf32>
    %2 = tpu.matmul %0, %1, %cst {dimension_numbers = #tpu.dot_dimension_numbers<[1], [0], [0], [1], [0, 0, 1, 1], [], []>} : vector<2x512xf32>, vector<512x32xf32>, vector<2x32xf32> -> vector<2x32xf32>
    %c0_3 = arith.constant 0 : index
    %c0_4 = arith.constant 0 : index
    %3 = vector.load %arg2[%c0_3, %c0_4] : memref<1x32xf32, #tpu.memory_space<vmem>>, vector<1x32xf32>
    %4 = vector.broadcast %3 : vector<1x32xf32> to vector<2x32xf32>
    %5 = arith.addf %2, %4 : vector<2x32xf32>
    %cst_5 = arith.constant 0.000000e+00 : f32
    %6 = vector.broadcast %cst_5 : f32 to vector<2x32xf32>
    %7 = arith.maximumf %5, %6 : vector<2x32xf32>
    %c0_6 = arith.constant 0 : index
    %c0_7 = arith.constant 0 : index
    %8 = vector.load %arg8[%c0_6, %c0_7] : memref<2x32xf32, #tpu.memory_space<vmem>>, vector<2x32xf32>
    tpu.vector_store %arg8[%c0_6, %c0_7], %7 {strides = array<i32>} : memref<2x32xf32, #tpu.memory_space<vmem>>, vector<2x32xf32>,
    %c0_8 = arith.constant 0 : index
    %c0_9 = arith.constant 0 : index
    %9 = vector.load %arg3[%c0_8, %c0_9] : memref<16x1xi32, #tpu.memory_space<vmem>>, vector<16x1xi32>
    %10 = tpu.iota {dimensions = array<i32: 1>} : vector<16x50xi32>
    %11 = vector.broadcast %9 : vector<16x1xi32> to vector<16x50xi32>
    %12 = arith.cmpi eq, %11, %10 : vector<16x50xi32>
    %13 = arith.extui %12 : vector<16x50xi1> to vector<16x50xi32>
    %14 = arith.sitofp %13 : vector<16x50xi32> to vector<16x50xf32>
    %c0_10 = arith.constant 0 : index
    %c0_11 = arith.constant 0 : index
    %15 = vector.load %arg4[%c0_10, %c0_11] : memref<50x96xf32, #tpu.memory_space<vmem>>, vector<50x96xf32>
    %cst_12 = arith.constant dense<0.000000e+00> : vector<16x96xf32>
    %16 = tpu.matmul %14, %15, %cst_12 {dimension_numbers = #tpu.dot_dimension_numbers<[1], [0], [0], [1], [0, 0, 1, 1], [], []>} : vector<16x50xf32>, vector<50x96xf32>, vector<16x96xf32> -> vector<16x96xf32>
    %c0_13 = arith.constant 0 : index
    %c0_14 = arith.constant 0 : index
    %17 = vector.load %arg5[%c0_13, %c0_14] : memref<1x96xf32, #tpu.memory_space<vmem>>, vector<1x96xf32>
    %18 = vector.broadcast %17 : vector<1x96xf32> to vector<16x96xf32>
    %19 = arith.addf %16, %18 : vector<16x96xf32>
    %c0_15 = arith.constant 0 : index
    %c0_16 = arith.constant 0 : index
    %20 = vector.load %arg6[%c0_15, %c0_16] : memref<32x96xf32, #tpu.memory_space<vmem>>, vector<32x96xf32>
    %c0_17 = arith.constant 0 : index
    %c0_18 = arith.constant 0 : index
    %21 = vector.load %arg7[%c0_17, %c0_18] : memref<1x32xf32, #tpu.memory_space<vmem>>, vector<1x32xf32>
    %cst_19 = arith.constant 0.000000e+00 : f32
    %22 = vector.broadcast %cst_19 : f32 to vector<2x32xf32>
    %23 = vector.extract_strided_slice %19 {offsets = [0, 0], sizes = [2, 96], strides = [1, 1]} : vector<16x96xf32> to vector<2x96xf32>
    %cst_20 = arith.constant dense<0.000000e+00> : vector<2x96xf32>
    %24 = tpu.matmul %22, %20, %cst_20 {dimension_numbers = #tpu.dot_dimension_numbers<[1], [0], [0], [1], [0, 0, 1, 1], [], []>} : vector<2x32xf32>, vector<32x96xf32>, vector<2x96xf32> -> vector<2x96xf32>
    %25 = vector.extract_strided_slice %23 {offsets = [0, 0], sizes = [2, 32], strides = [1, 1]} : vector<2x96xf32> to vector<2x32xf32>
    %26 = vector.extract_strided_slice %24 {offsets = [0, 0], sizes = [2, 32], strides = [1, 1]} : vector<2x96xf32> to vector<2x32xf32>
    %27 = arith.addf %25, %26 : vector<2x32xf32>
    %28 = arith.negf %27 : vector<2x32xf32>
    %29 = math.exp %28 : vector<2x32xf32>
    %cst_21 = arith.constant 1.000000e+00 : f32
    %30 = vector.broadcast %cst_21 : f32 to vector<2x32xf32>
    %31 = arith.addf %30, %29 : vector<2x32xf32>
    %32 = arith.divf %30, %31 : vector<2x32xf32>
    %33 = vector.extract_strided_slice %23 {offsets = [0, 32], sizes = [2, 32], strides = [1, 1]} : vector<2x96xf32> to vector<2x32xf32>
    %34 = vector.extract_strided_slice %24 {offsets = [0, 32], sizes = [2, 32], strides = [1, 1]} : vector<2x96xf32> to vector<2x32xf32>
    %35 = arith.addf %33, %34 : vector<2x32xf32>
    %36 = arith.negf %35 : vector<2x32xf32>
    %37 = math.exp %36 : vector<2x32xf32>
    %cst_22 = arith.constant 1.000000e+00 : f32
    %38 = vector.broadcast %cst_22 : f32 to vector<2x32xf32>
    %39 = arith.addf %38, %37 : vector<2x32xf32>
    %40 = arith.divf %38, %39 : vector<2x32xf32>
    %41 = vector.extract_strided_slice %23 {offsets = [0, 64], sizes = [2, 32], strides = [1, 1]} : vector<2x96xf32> to vector<2x32xf32>
    %42 = vector.extract_strided_slice %24 {offsets = [0, 64], sizes = [2, 32], strides = [1, 1]} : vector<2x96xf32> to vector<2x32xf32>
    %43 = vector.broadcast %21 : vector<1x32xf32> to vector<2x32xf32>
    %44 = arith.addf %42, %43 : vector<2x32xf32>
    %45 = arith.mulf %32, %44 : vector<2x32xf32>
    %46 = arith.addf %41, %45 : vector<2x32xf32>
    %47 = math.tanh %46 : vector<2x32xf32>
    %cst_23 = arith.constant 1.000000e+00 : f32
    %48 = vector.broadcast %cst_23 : f32 to vector<2x32xf32>
    %49 = arith.subf %48, %40 : vector<2x32xf32>
    %50 = arith.mulf %49, %47 : vector<2x32xf32>
    %51 = arith.mulf %40, %22 : vector<2x32xf32>
    %52 = arith.addf %50, %51 : vector<2x32xf32>
    %53 = vector.extract_strided_slice %19 {offsets = [2, 0], sizes = [2, 96], strides = [1, 1]} : vector<16x96xf32> to vector<2x96xf32>
    %cst_24 = arith.constant dense<0.000000e+00> : vector<2x96xf32>
    %54 = tpu.matmul %52, %20, %cst_24 {dimension_numbers = #tpu.dot_dimension_numbers<[1], [0], [0], [1], [0, 0, 1, 1], [], []>} : vector<2x32xf32>, vector<32x96xf32>, vector<2x96xf32> -> vector<2x96xf32>
    %55 = vector.extract_strided_slice %53 {offsets = [0, 0], sizes = [2, 32], strides = [1, 1]} : vector<2x96xf32> to vector<2x32xf32>
    %56 = vector.extract_strided_slice %54 {offsets = [0, 0], sizes = [2, 32], strides = [1, 1]} : vector<2x96xf32> to vector<2x32xf32>
    %57 = arith.addf %55, %56 : vector<2x32xf32>
    %58 = arith.negf %57 : vector<2x32xf32>
    %59 = math.exp %58 : vector<2x32xf32>
    %cst_25 = arith.constant 1.000000e+00 : f32
    %60 = vector.broadcast %cst_25 : f32 to vector<2x32xf32>
    %61 = arith.addf %60, %59 : vector<2x32xf32>
    %62 = arith.divf %60, %61 : vector<2x32xf32>
    %63 = vector.extract_strided_slice %53 {offsets = [0, 32], sizes = [2, 32], strides = [1, 1]} : vector<2x96xf32> to vector<2x32xf32>
    %64 = vector.extract_strided_slice %54 {offsets = [0, 32], sizes = [2, 32], strides = [1, 1]} : vector<2x96xf32> to vector<2x32xf32>
    %65 = arith.addf %63, %64 : vector<2x32xf32>
    %66 = arith.negf %65 : vector<2x32xf32>
    %67 = math.exp %66 : vector<2x32xf32>
    %cst_26 = arith.constant 1.000000e+00 : f32
    %68 = vector.broadcast %cst_26 : f32 to vector<2x32xf32>
    %69 = arith.addf %68, %67 : vector<2x32xf32>
    %70 = arith.divf %68, %69 : vector<2x32xf32>
    %71 = vector.extract_strided_slice %53 {offsets = [0, 64], sizes = [2, 32], strides = [1, 1]} : vector<2x96xf32> to vector<2x32xf32>
    %72 = vector.extract_strided_slice %54 {offsets = [0, 64], sizes = [2, 32], strides = [1, 1]} : vector<2x96xf32> to vector<2x32xf32>
    %73 = vector.broadcast %21 : vector<1x32xf32> to vector<2x32xf32>
    %74 = arith.addf %72, %73 : vector<2x32xf32>
    %75 = arith.mulf %62, %74 : vector<2x32xf32>
    %76 = arith.addf %71, %75 : vector<2x32xf32>
    %77 = math.tanh %76 : vector<2x32xf32>
    %cst_27 = arith.constant 1.000000e+00 : f32
    %78 = vector.broadcast %cst_27 : f32 to vector<2x32xf32>
    %79 = arith.subf %78, %70 : vector<2x32xf32>
    %80 = arith.mulf %79, %77 : vector<2x32xf32>
    %81 = arith.mulf %70, %52 : vector<2x32xf32>
    %82 = arith.addf %80, %81 : vector<2x32xf32>
    %83 = vector.extract_strided_slice %19 {offsets = [4, 0], sizes = [2, 96], strides = [1, 1]} : vector<16x96xf32> to vector<2x96xf32>
    %cst_28 = arith.constant dense<0.000000e+00> : vector<2x96xf32>
    %84 = tpu.matmul %82, %20, %cst_28 {dimension_numbers = #tpu.dot_dimension_numbers<[1], [0], [0], [1], [0, 0, 1, 1], [], []>} : vector<2x32xf32>, vector<32x96xf32>, vector<2x96xf32> -> vector<2x96xf32>
    %85 = vector.extract_strided_slice %83 {offsets = [0, 0], sizes = [2, 32], strides = [1, 1]} : vector<2x96xf32> to vector<2x32xf32>
    %86 = vector.extract_strided_slice %84 {offsets = [0, 0], sizes = [2, 32], strides = [1, 1]} : vector<2x96xf32> to vector<2x32xf32>
    %87 = arith.addf %85, %86 : vector<2x32xf32>
    %88 = arith.negf %87 : vector<2x32xf32>
    %89 = math.exp %88 : vector<2x32xf32>
    %cst_29 = arith.constant 1.000000e+00 : f32
    %90 = vector.broadcast %cst_29 : f32 to vector<2x32xf32>
    %91 = arith.addf %90, %89 : vector<2x32xf32>
    %92 = arith.divf %90, %91 : vector<2x32xf32>
    %93 = vector.extract_strided_slice %83 {offsets = [0, 32], sizes = [2, 32], strides = [1, 1]} : vector<2x96xf32> to vector<2x32xf32>
    %94 = vector.extract_strided_slice %84 {offsets = [0, 32], sizes = [2, 32], strides = [1, 1]} : vector<2x96xf32> to vector<2x32xf32>
    %95 = arith.addf %93, %94 : vector<2x32xf32>
    %96 = arith.negf %95 : vector<2x32xf32>
    %97 = math.exp %96 : vector<2x32xf32>
    %cst_30 = arith.constant 1.000000e+00 : f32
    %98 = vector.broadcast %cst_30 : f32 to vector<2x32xf32>
    %99 = arith.addf %98, %97 : vector<2x32xf32>
    %100 = arith.divf %98, %99 : vector<2x32xf32>
    %101 = vector.extract_strided_slice %83 {offsets = [0, 64], sizes = [2, 32], strides = [1, 1]} : vector<2x96xf32> to vector<2x32xf32>
    %102 = vector.extract_strided_slice %84 {offsets = [0, 64], sizes = [2, 32], strides = [1, 1]} : vector<2x96xf32> to vector<2x32xf32>
    %103 = vector.broadcast %21 : vector<1x32xf32> to vector<2x32xf32>
    %104 = arith.addf %102, %103 : vector<2x32xf32>
    %105 = arith.mulf %92, %104 : vector<2x32xf32>
    %106 = arith.addf %101, %105 : vector<2x32xf32>
    %107 = math.tanh %106 : vector<2x32xf32>
    %cst_31 = arith.constant 1.000000e+00 : f32
    %108 = vector.broadcast %cst_31 : f32 to vector<2x32xf32>
    %109 = arith.subf %108, %100 : vector<2x32xf32>
    %110 = arith.mulf %109, %107 : vector<2x32xf32>
    %111 = arith.mulf %100, %82 : vector<2x32xf32>
    %112 = arith.addf %110, %111 : vector<2x32xf32>
    %113 = vector.extract_strided_slice %19 {offsets = [6, 0], sizes = [2, 96], strides = [1, 1]} : vector<16x96xf32> to vector<2x96xf32>
    %cst_32 = arith.constant dense<0.000000e+00> : vector<2x96xf32>
    %114 = tpu.matmul %112, %20, %cst_32 {dimension_numbers = #tpu.dot_dimension_numbers<[1], [0], [0], [1], [0, 0, 1, 1], [], []>} : vector<2x32xf32>, vector<32x96xf32>, vector<2x96xf32> -> vector<2x96xf32>
    %115 = vector.extract_strided_slice %113 {offsets = [0, 0], sizes = [2, 32], strides = [1, 1]} : vector<2x96xf32> to vector<2x32xf32>
    %116 = vector.extract_strided_slice %114 {offsets = [0, 0], sizes = [2, 32], strides = [1, 1]} : vector<2x96xf32> to vector<2x32xf32>
    %117 = arith.addf %115, %116 : vector<2x32xf32>
    %118 = arith.negf %117 : vector<2x32xf32>
    %119 = math.exp %118 : vector<2x32xf32>
    %cst_33 = arith.constant 1.000000e+00 : f32
    %120 = vector.broadcast %cst_33 : f32 to vector<2x32xf32>
    %121 = arith.addf %120, %119 : vector<2x32xf32>
    %122 = arith.divf %120, %121 : vector<2x32xf32>
    %123 = vector.extract_strided_slice %113 {offsets = [0, 32], sizes = [2, 32], strides = [1, 1]} : vector<2x96xf32> to vector<2x32xf32>
    %124 = vector.extract_strided_slice %114 {offsets = [0, 32], sizes = [2, 32], strides = [1, 1]} : vector<2x96xf32> to vector<2x32xf32>
    %125 = arith.addf %123, %124 : vector<2x32xf32>
    %126 = arith.negf %125 : vector<2x32xf32>
    %127 = math.exp %126 : vector<2x32xf32>
    %cst_34 = arith.constant 1.000000e+00 : f32
    %128 = vector.broadcast %cst_34 : f32 to vector<2x32xf32>
    %129 = arith.addf %128, %127 : vector<2x32xf32>
    %130 = arith.divf %128, %129 : vector<2x32xf32>
    %131 = vector.extract_strided_slice %113 {offsets = [0, 64], sizes = [2, 32], strides = [1, 1]} : vector<2x96xf32> to vector<2x32xf32>
    %132 = vector.extract_strided_slice %114 {offsets = [0, 64], sizes = [2, 32], strides = [1, 1]} : vector<2x96xf32> to vector<2x32xf32>
    %133 = vector.broadcast %21 : vector<1x32xf32> to vector<2x32xf32>
    %134 = arith.addf %132, %133 : vector<2x32xf32>
    %135 = arith.mulf %122, %134 : vector<2x32xf32>
    %136 = arith.addf %131, %135 : vector<2x32xf32>
    %137 = math.tanh %136 : vector<2x32xf32>
    %cst_35 = arith.constant 1.000000e+00 : f32
    %138 = vector.broadcast %cst_35 : f32 to vector<2x32xf32>
    %139 = arith.subf %138, %130 : vector<2x32xf32>
    %140 = arith.mulf %139, %137 : vector<2x32xf32>
    %141 = arith.mulf %130, %112 : vector<2x32xf32>
    %142 = arith.addf %140, %141 : vector<2x32xf32>
    %143 = vector.extract_strided_slice %19 {offsets = [8, 0], sizes = [2, 96], strides = [1, 1]} : vector<16x96xf32> to vector<2x96xf32>
    %cst_36 = arith.constant dense<0.000000e+00> : vector<2x96xf32>
    %144 = tpu.matmul %142, %20, %cst_36 {dimension_numbers = #tpu.dot_dimension_numbers<[1], [0], [0], [1], [0, 0, 1, 1], [], []>} : vector<2x32xf32>, vector<32x96xf32>, vector<2x96xf32> -> vector<2x96xf32>
    %145 = vector.extract_strided_slice %143 {offsets = [0, 0], sizes = [2, 32], strides = [1, 1]} : vector<2x96xf32> to vector<2x32xf32>
    %146 = vector.extract_strided_slice %144 {offsets = [0, 0], sizes = [2, 32], strides = [1, 1]} : vector<2x96xf32> to vector<2x32xf32>
    %147 = arith.addf %145, %146 : vector<2x32xf32>
    %148 = arith.negf %147 : vector<2x32xf32>
    %149 = math.exp %148 : vector<2x32xf32>
    %cst_37 = arith.constant 1.000000e+00 : f32
    %150 = vector.broadcast %cst_37 : f32 to vector<2x32xf32>
    %151 = arith.addf %150, %149 : vector<2x32xf32>
    %152 = arith.divf %150, %151 : vector<2x32xf32>
    %153 = vector.extract_strided_slice %143 {offsets = [0, 32], sizes = [2, 32], strides = [1, 1]} : vector<2x96xf32> to vector<2x32xf32>
    %154 = vector.extract_strided_slice %144 {offsets = [0, 32], sizes = [2, 32], strides = [1, 1]} : vector<2x96xf32> to vector<2x32xf32>
    %155 = arith.addf %153, %154 : vector<2x32xf32>
    %156 = arith.negf %155 : vector<2x32xf32>
    %157 = math.exp %156 : vector<2x32xf32>
    %cst_38 = arith.constant 1.000000e+00 : f32
    %158 = vector.broadcast %cst_38 : f32 to vector<2x32xf32>
    %159 = arith.addf %158, %157 : vector<2x32xf32>
    %160 = arith.divf %158, %159 : vector<2x32xf32>
    %161 = vector.extract_strided_slice %143 {offsets = [0, 64], sizes = [2, 32], strides = [1, 1]} : vector<2x96xf32> to vector<2x32xf32>
    %162 = vector.extract_strided_slice %144 {offsets = [0, 64], sizes = [2, 32], strides = [1, 1]} : vector<2x96xf32> to vector<2x32xf32>
    %163 = vector.broadcast %21 : vector<1x32xf32> to vector<2x32xf32>
    %164 = arith.addf %162, %163 : vector<2x32xf32>
    %165 = arith.mulf %152, %164 : vector<2x32xf32>
    %166 = arith.addf %161, %165 : vector<2x32xf32>
    %167 = math.tanh %166 : vector<2x32xf32>
    %cst_39 = arith.constant 1.000000e+00 : f32
    %168 = vector.broadcast %cst_39 : f32 to vector<2x32xf32>
    %169 = arith.subf %168, %160 : vector<2x32xf32>
    %170 = arith.mulf %169, %167 : vector<2x32xf32>
    %171 = arith.mulf %160, %142 : vector<2x32xf32>
    %172 = arith.addf %170, %171 : vector<2x32xf32>
    %173 = vector.extract_strided_slice %19 {offsets = [10, 0], sizes = [2, 96], strides = [1, 1]} : vector<16x96xf32> to vector<2x96xf32>
    %cst_40 = arith.constant dense<0.000000e+00> : vector<2x96xf32>
    %174 = tpu.matmul %172, %20, %cst_40 {dimension_numbers = #tpu.dot_dimension_numbers<[1], [0], [0], [1], [0, 0, 1, 1], [], []>} : vector<2x32xf32>, vector<32x96xf32>, vector<2x96xf32> -> vector<2x96xf32>
    %175 = vector.extract_strided_slice %173 {offsets = [0, 0], sizes = [2, 32], strides = [1, 1]} : vector<2x96xf32> to vector<2x32xf32>
    %176 = vector.extract_strided_slice %174 {offsets = [0, 0], sizes = [2, 32], strides = [1, 1]} : vector<2x96xf32> to vector<2x32xf32>
    %177 = arith.addf %175, %176 : vector<2x32xf32>
    %178 = arith.negf %177 : vector<2x32xf32>
    %179 = math.exp %178 : vector<2x32xf32>
    %cst_41 = arith.constant 1.000000e+00 : f32
    %180 = vector.broadcast %cst_41 : f32 to vector<2x32xf32>
    %181 = arith.addf %180, %179 : vector<2x32xf32>
    %182 = arith.divf %180, %181 : vector<2x32xf32>
    %183 = vector.extract_strided_slice %173 {offsets = [0, 32], sizes = [2, 32], strides = [1, 1]} : vector<2x96xf32> to vector<2x32xf32>
    %184 = vector.extract_strided_slice %174 {offsets = [0, 32], sizes = [2, 32], strides = [1, 1]} : vector<2x96xf32> to vector<2x32xf32>
    %185 = arith.addf %183, %184 : vector<2x32xf32>
    %186 = arith.negf %185 : vector<2x32xf32>
    %187 = math.exp %186 : vector<2x32xf32>
    %cst_42 = arith.constant 1.000000e+00 : f32
    %188 = vector.broadcast %cst_42 : f32 to vector<2x32xf32>
    %189 = arith.addf %188, %187 : vector<2x32xf32>
    %190 = arith.divf %188, %189 : vector<2x32xf32>
    %191 = vector.extract_strided_slice %173 {offsets = [0, 64], sizes = [2, 32], strides = [1, 1]} : vector<2x96xf32> to vector<2x32xf32>
    %192 = vector.extract_strided_slice %174 {offsets = [0, 64], sizes = [2, 32], strides = [1, 1]} : vector<2x96xf32> to vector<2x32xf32>
    %193 = vector.broadcast %21 : vector<1x32xf32> to vector<2x32xf32>
    %194 = arith.addf %192, %193 : vector<2x32xf32>
    %195 = arith.mulf %182, %194 : vector<2x32xf32>
    %196 = arith.addf %191, %195 : vector<2x32xf32>
    %197 = math.tanh %196 : vector<2x32xf32>
    %cst_43 = arith.constant 1.000000e+00 : f32
    %198 = vector.broadcast %cst_43 : f32 to vector<2x32xf32>
    %199 = arith.subf %198, %190 : vector<2x32xf32>
    %200 = arith.mulf %199, %197 : vector<2x32xf32>
    %201 = arith.mulf %190, %172 : vector<2x32xf32>
    %202 = arith.addf %200, %201 : vector<2x32xf32>
    %203 = vector.extract_strided_slice %19 {offsets = [12, 0], sizes = [2, 96], strides = [1, 1]} : vector<16x96xf32> to vector<2x96xf32>
    %cst_44 = arith.constant dense<0.000000e+00> : vector<2x96xf32>
    %204 = tpu.matmul %202, %20, %cst_44 {dimension_numbers = #tpu.dot_dimension_numbers<[1], [0], [0], [1], [0, 0, 1, 1], [], []>} : vector<2x32xf32>, vector<32x96xf32>, vector<2x96xf32> -> vector<2x96xf32>
    %205 = vector.extract_strided_slice %203 {offsets = [0, 0], sizes = [2, 32], strides = [1, 1]} : vector<2x96xf32> to vector<2x32xf32>
    %206 = vector.extract_strided_slice %204 {offsets = [0, 0], sizes = [2, 32], strides = [1, 1]} : vector<2x96xf32> to vector<2x32xf32>
    %207 = arith.addf %205, %206 : vector<2x32xf32>
    %208 = arith.negf %207 : vector<2x32xf32>
    %209 = math.exp %208 : vector<2x32xf32>
    %cst_45 = arith.constant 1.000000e+00 : f32
    %210 = vector.broadcast %cst_45 : f32 to vector<2x32xf32>
    %211 = arith.addf %210, %209 : vector<2x32xf32>
    %212 = arith.divf %210, %211 : vector<2x32xf32>
    %213 = vector.extract_strided_slice %203 {offsets = [0, 32], sizes = [2, 32], strides = [1, 1]} : vector<2x96xf32> to vector<2x32xf32>
    %214 = vector.extract_strided_slice %204 {offsets = [0, 32], sizes = [2, 32], strides = [1, 1]} : vector<2x96xf32> to vector<2x32xf32>
    %215 = arith.addf %213, %214 : vector<2x32xf32>
    %216 = arith.negf %215 : vector<2x32xf32>
    %217 = math.exp %216 : vector<2x32xf32>
    %cst_46 = arith.constant 1.000000e+00 : f32
    %218 = vector.broadcast %cst_46 : f32 to vector<2x32xf32>
    %219 = arith.addf %218, %217 : vector<2x32xf32>
    %220 = arith.divf %218, %219 : vector<2x32xf32>
    %221 = vector.extract_strided_slice %203 {offsets = [0, 64], sizes = [2, 32], strides = [1, 1]} : vector<2x96xf32> to vector<2x32xf32>
    %222 = vector.extract_strided_slice %204 {offsets = [0, 64], sizes = [2, 32], strides = [1, 1]} : vector<2x96xf32> to vector<2x32xf32>
    %223 = vector.broadcast %21 : vector<1x32xf32> to vector<2x32xf32>
    %224 = arith.addf %222, %223 : vector<2x32xf32>
    %225 = arith.mulf %212, %224 : vector<2x32xf32>
    %226 = arith.addf %221, %225 : vector<2x32xf32>
    %227 = math.tanh %226 : vector<2x32xf32>
    %cst_47 = arith.constant 1.000000e+00 : f32
    %228 = vector.broadcast %cst_47 : f32 to vector<2x32xf32>
    %229 = arith.subf %228, %220 : vector<2x32xf32>
    %230 = arith.mulf %229, %227 : vector<2x32xf32>
    %231 = arith.mulf %220, %202 : vector<2x32xf32>
    %232 = arith.addf %230, %231 : vector<2x32xf32>
    %233 = vector.extract_strided_slice %19 {offsets = [14, 0], sizes = [2, 96], strides = [1, 1]} : vector<16x96xf32> to vector<2x96xf32>
    %cst_48 = arith.constant dense<0.000000e+00> : vector<2x96xf32>
    %234 = tpu.matmul %232, %20, %cst_48 {dimension_numbers = #tpu.dot_dimension_numbers<[1], [0], [0], [1], [0, 0, 1, 1], [], []>} : vector<2x32xf32>, vector<32x96xf32>, vector<2x96xf32> -> vector<2x96xf32>
    %235 = vector.extract_strided_slice %233 {offsets = [0, 0], sizes = [2, 32], strides = [1, 1]} : vector<2x96xf32> to vector<2x32xf32>
    %236 = vector.extract_strided_slice %234 {offsets = [0, 0], sizes = [2, 32], strides = [1, 1]} : vector<2x96xf32> to vector<2x32xf32>
    %237 = arith.addf %235, %236 : vector<2x32xf32>
    %238 = arith.negf %237 : vector<2x32xf32>
    %239 = math.exp %238 : vector<2x32xf32>
    %cst_49 = arith.constant 1.000000e+00 : f32
    %240 = vector.broadcast %cst_49 : f32 to vector<2x32xf32>
    %241 = arith.addf %240, %239 : vector<2x32xf32>
    %242 = arith.divf %240, %241 : vector<2x32xf32>
    %243 = vector.extract_strided_slice %233 {offsets = [0, 32], sizes = [2, 32], strides = [1, 1]} : vector<2x96xf32> to vector<2x32xf32>
    %244 = vector.extract_strided_slice %234 {offsets = [0, 32], sizes = [2, 32], strides = [1, 1]} : vector<2x96xf32> to vector<2x32xf32>
    %245 = arith.addf %243, %244 : vector<2x32xf32>
    %246 = arith.negf %245 : vector<2x32xf32>
    %247 = math.exp %246 : vector<2x32xf32>
    %cst_50 = arith.constant 1.000000e+00 : f32
    %248 = vector.broadcast %cst_50 : f32 to vector<2x32xf32>
    %249 = arith.addf %248, %247 : vector<2x32xf32>
    %250 = arith.divf %248, %249 : vector<2x32xf32>
    %251 = vector.extract_strided_slice %233 {offsets = [0, 64], sizes = [2, 32], strides = [1, 1]} : vector<2x96xf32> to vector<2x32xf32>
    %252 = vector.extract_strided_slice %234 {offsets = [0, 64], sizes = [2, 32], strides = [1, 1]} : vector<2x96xf32> to vector<2x32xf32>
    %253 = vector.broadcast %21 : vector<1x32xf32> to vector<2x32xf32>
    %254 = arith.addf %252, %253 : vector<2x32xf32>
    %255 = arith.mulf %242, %254 : vector<2x32xf32>
    %256 = arith.addf %251, %255 : vector<2x32xf32>
    %257 = math.tanh %256 : vector<2x32xf32>
    %cst_51 = arith.constant 1.000000e+00 : f32
    %258 = vector.broadcast %cst_51 : f32 to vector<2x32xf32>
    %259 = arith.subf %258, %250 : vector<2x32xf32>
    %260 = arith.mulf %259, %257 : vector<2x32xf32>
    %261 = arith.mulf %250, %232 : vector<2x32xf32>
    %262 = arith.addf %260, %261 : vector<2x32xf32>
    %c0_52 = arith.constant 0 : index
    %c0_53 = arith.constant 0 : index
    %263 = vector.load %arg9[%c0_52, %c0_53] : memref<2x32xf32, #tpu.memory_space<vmem>>, vector<2x32xf32>
    tpu.vector_store %arg9[%c0_52, %c0_53], %262 {strides = array<i32>} : memref<2x32xf32, #tpu.memory_space<vmem>>, vector<2x32xf32>,
    return
  }
}

</mosaic_0001>

<llo_original>
// kernel: utterances_and_block_region_counters_encode.1
$region0: #{utterances_and_block_region_counters_encode.1}
  #allocation0 [shape = 'u32[]', space=smem, size = 0x4, offset = 0x4, fixed_abs, tag = 'smem constant byte address 0x4 - core index']
  #allocation1 [shape = 'u32[144,128]{1,0:T(1,128)}', space=vmem, size = 0x12000, scoped, tag = 'internal scratch']
  %s0 = inlined_call_operand.vmem [shape: f32[2,512], index: 0, kind: input, shape index: {}]
  %s1 = inlined_call_operand.vmem [shape: f32[512,32], index: 1, kind: input, shape index: {}]
  %s2 = inlined_call_operand.vmem [shape: f32[1,32], index: 2, kind: input, shape index: {}]
  %s3 = inlined_call_operand.vmem [shape: s32[16,1], index: 3, kind: input, shape index: {}]
  %s4 = inlined_call_operand.vmem [shape: f32[50,96], index: 4, kind: input, shape index: {}]
  %s5 = inlined_call_operand.vmem [shape: f32[1,96], index: 5, kind: input, shape index: {}]
  %s6 = inlined_call_operand.vmem [shape: f32[32,96], index: 6, kind: input, shape index: {}]
  %s7 = inlined_call_operand.vmem [shape: f32[1,32], index: 7, kind: input, shape index: {}]
  %s8 = inlined_call_operand.vmem [shape: f32[2,32], index: 8, kind: output, shape index: {0}]
  %s9 = inlined_call_operand.hbm [shape: f32[2,32], index: 9, kind: output, shape index: {1}]
  %10 = xla_tuple %s8, %s9
  %s11 = sld [smem:[#allocation0]]
  $region50: #{utterances_and_block_region_counters_encode.1} parent=0
    _
  %s13 = ssub.s32 1, %s11
  %s14 = scalar_select 0, %s13, %s11
  $region1: #{utterances_and_block_region_counters_encode.1} parent=0
    #allocation2 [shape = 'u8[1024]{0}', space=vmem, size = 0x400, scoped, tag = 'output window, operand 1, single buffered']
    #allocation3 [shape = 's32[1]{0}', space=sflag, size = 0x4, scoped, tag = 'scoped memory for utterances_and_block_region_counters_encode.1']
    %15 = vsyncpa [#allocation3], 0
    // Predicated region
    $region2: #{utterances_and_block_region_counters_encode.1} parent=1 // pred_check
      _
    $region3: #{utterances_and_block_region_counters_encode.1} parent=1 // pred_check_branch
      %17 = sbr.rel (0) target = $region5
    $region4: #{utterances_and_block_region_counters_encode.1} parent=1 // pred_region
      _
    $region5: #{utterances_and_block_region_counters_encode.1} parent=1 // pred_fallthru
      _
    // Predicated region
    $region6: #{utterances_and_block_region_counters_encode.1} parent=1 // pred_check
      _
    $region7: #{utterances_and_block_region_counters_encode.1} parent=1 // pred_check_branch
      %19 = sbr.rel (0) target = $region9
    $region8: #{utterances_and_block_region_counters_encode.1} parent=1 // pred_region
      _
    $region9: #{utterances_and_block_region_counters_encode.1} parent=1 // pred_fallthru
      _
    // Predicated region
    $region10: #{utterances_and_block_region_counters_encode.1} parent=1 // pred_check
      _
    $region11: #{utterances_and_block_region_counters_encode.1} parent=1 // pred_check_branch
      %21 = sbr.rel (0) target = $region13
    $region12: #{utterances_and_block_region_counters_encode.1} parent=1 // pred_region
      _
    $region13: #{utterances_and_block_region_counters_encode.1} parent=1 // pred_fallthru
      _
    // Predicated region
    $region14: #{utterances_and_block_region_counters_encode.1} parent=1 // pred_check
      _
    $region15: #{utterances_and_block_region_counters_encode.1} parent=1 // pred_check_branch
      %23 = sbr.rel (0) target = $region17
    $region16: #{utterances_and_block_region_counters_encode.1} parent=1 // pred_region
      _
    $region17: #{utterances_and_block_region_counters_encode.1} parent=1 // pred_fallthru
      _
    // Predicated region
    $region18: #{utterances_and_block_region_counters_encode.1} parent=1 // pred_check
      _
    $region19: #{utterances_and_block_region_counters_encode.1} parent=1 // pred_check_branch
      %25 = sbr.rel (0) target = $region21
    $region20: #{utterances_and_block_region_counters_encode.1} parent=1 // pred_region
      _
    $region21: #{utterances_and_block_region_counters_encode.1} parent=1 // pred_fallthru
      _
    // Predicated region
    $region22: #{utterances_and_block_region_counters_encode.1} parent=1 // pred_check
      _
    $region23: #{utterances_and_block_region_counters_encode.1} parent=1 // pred_check_branch
      %27 = sbr.rel (0) target = $region25
    $region24: #{utterances_and_block_region_counters_encode.1} parent=1 // pred_region
      _
    $region25: #{utterances_and_block_region_counters_encode.1} parent=1 // pred_fallthru
      _
    // Predicated region
    $region26: #{utterances_and_block_region_counters_encode.1} parent=1 // pred_check
      _
    $region27: #{utterances_and_block_region_counters_encode.1} parent=1 // pred_check_branch
      %29 = sbr.rel (0) target = $region29
    $region28: #{utterances_and_block_region_counters_encode.1} parent=1 // pred_region
      _
    $region29: #{utterances_and_block_region_counters_encode.1} parent=1 // pred_fallthru
      _
    // Predicated region
    $region30: #{utterances_and_block_region_counters_encode.1} parent=1 // pred_check
      _
    $region31: #{utterances_and_block_region_counters_encode.1} parent=1 // pred_check_branch
      %31 = sbr.rel (0) target = $region33
    $region32: #{utterances_and_block_region_counters_encode.1} parent=1 // pred_region
      _
    $region33: #{utterances_and_block_region_counters_encode.1} parent=1 // pred_fallthru
      _
    %v32 = vld [vmem:[%s0] sm:$0xff]
    %v33 = vld [vmem:[%s1] sm:$0xff]
    %v34 = vld [vmem:[%s1 + $0x8] sm:$0xff]
    %v35 = vld [vmem:[%s1 + $0x10] sm:$0xff]
    %v36 = vld [vmem:[%s1 + $0x18] sm:$0xff]
    %v37 = vld [vmem:[%s1 + $0x20] sm:$0xff]
    %v38 = vld [vmem:[%s1 + $0x28] sm:$0xff]
    %v39 = vld [vmem:[%s1 + $0x30] sm:$0xff]
    %v40 = vld [vmem:[%s1 + $0x38] sm:$0xff]
    %v41 = vld [vmem:[%s1 + $0x40] sm:$0xff]
    %v42 = vld [vmem:[%s1 + $0x48] sm:$0xff]
    %v43 = vld [vmem:[%s1 + $0x50] sm:$0xff]
    %v44 = vld [vmem:[%s1 + $0x58] sm:$0xff]
    %v45 = vld [vmem:[%s1 + $0x60] sm:$0xff]
    %v46 = vld [vmem:[%s1 + $0x68] sm:$0xff]
    %v47 = vld [vmem:[%s1 + $0x70] sm:$0xff]
    %v48 = vld [vmem:[%s1 + $0x78] sm:$0xff]
    %v49 = vld [vmem:[%s1 + $0x80] sm:$0xff]
    %v50 = vld [vmem:[%s1 + $0x88] sm:$0xff]
    %v51 = vld [vmem:[%s1 + $0x90] sm:$0xff]
    %v52 = vld [vmem:[%s1 + $0x98] sm:$0xff]
    %v53 = vld [vmem:[%s1 + $0xa0] sm:$0xff]
    %v54 = vld [vmem:[%s1 + $0xa8] sm:$0xff]
    %v55 = vld [vmem:[%s1 + $0xb0] sm:$0xff]
    %v56 = vld [vmem:[%s1 + $0xb8] sm:$0xff]
    %v57 = vld [vmem:[%s1 + $0xc0] sm:$0xff]
    %v58 = vld [vmem:[%s1 + $0xc8] sm:$0xff]
    %v59 = vld [vmem:[%s1 + $0xd0] sm:$0xff]
    %v60 = vld [vmem:[%s1 + $0xd8] sm:$0xff]
    %v61 = vld [vmem:[%s1 + $0xe0] sm:$0xff]
    %v62 = vld [vmem:[%s1 + $0xe8] sm:$0xff]
    %v63 = vld [vmem:[%s1 + $0xf0] sm:$0xff]
    %v64 = vld [vmem:[%s1 + $0xf8] sm:$0xff]
    %v65 = vld [vmem:[%s1 + $0x100] sm:$0xff]
    %v66 = vld [vmem:[%s1 + $0x108] sm:$0xff]
    %v67 = vld [vmem:[%s1 + $0x110] sm:$0xff]
    %v68 = vld [vmem:[%s1 + $0x118] sm:$0xff]
    %v69 = vld [vmem:[%s1 + $0x120] sm:$0xff]
    %v70 = vld [vmem:[%s1 + $0x128] sm:$0xff]
    %v71 = vld [vmem:[%s1 + $0x130] sm:$0xff]
    %v72 = vld [vmem:[%s1 + $0x138] sm:$0xff]
    %v73 = vld [vmem:[%s1 + $0x140] sm:$0xff]
    %v74 = vld [vmem:[%s1 + $0x148] sm:$0xff]
    %v75 = vld [vmem:[%s1 + $0x150] sm:$0xff]
    %v76 = vld [vmem:[%s1 + $0x158] sm:$0xff]
    %v77 = vld [vmem:[%s1 + $0x160] sm:$0xff]
    %v78 = vld [vmem:[%s1 + $0x168] sm:$0xff]
    %v79 = vld [vmem:[%s1 + $0x170] sm:$0xff]
    %v80 = vld [vmem:[%s1 + $0x178] sm:$0xff]
    %v81 = vld [vmem:[%s1 + $0x180] sm:$0xff]
    %v82 = vld [vmem:[%s1 + $0x188] sm:$0xff]
    %v83 = vld [vmem:[%s1 + $0x190] sm:$0xff]
    %v84 = vld [vmem:[%s1 + $0x198] sm:$0xff]
    %v85 = vld [vmem:[%s1 + $0x1a0] sm:$0xff]
    %v86 = vld [vmem:[%s1 + $0x1a8] sm:$0xff]
    %v87 = vld [vmem:[%s1 + $0x1b0] sm:$0xff]
    %v88 = vld [vmem:[%s1 + $0x1b8] sm:$0xff]
    %v89 = vld [vmem:[%s1 + $0x1c0] sm:$0xff]
    %v90 = vld [vmem:[%s1 + $0x1c8] sm:$0xff]
    %v91 = vld [vmem:[%s1 + $0x1d0] sm:$0xff]
    %v92 = vld [vmem:[%s1 + $0x1d8] sm:$0xff]
    %v93 = vld [vmem:[%s1 + $0x1e0] sm:$0xff]
    %v94 = vld [vmem:[%s1 + $0x1e8] sm:$0xff]
    %v95 = vld [vmem:[%s1 + $0x1f0] sm:$0xff]
    %v96 = vld [vmem:[%s1 + $0x1f8] sm:$0xff]
    %v97 = vld [vmem:[%s2] sm:$0x1]
    %v99 = vlaneseq
    %v100 = vshrl.u32 %v99, 7
    %v101 = vsub.s32 0, %v100
    %v102 = vrot.slane %v97, %v101
    %v105 = vcombine.high %v32, %v32
    %v107 = vunpack.c.l.s4 1983009808
    %v108 = vunpack.c.0.s8 %v107
    %v109 = vlaneseq
    %v110 = vshrl.u32 %v109, 7
    %v111 = vsub.s32 %v108, %v110
    %v112 = vrot.slane %v32, %v111
    %v114 = vunpack.c.l.s4 1983009808
    %v115 = vunpack.c.0.s8 %v114
    %v116 = vlaneseq
    %v117 = vshrl.u32 %v116, 7
    %v118 = vsub.s32 %v115, %v117
    %v119 = vrot.slane %v105, %v118
    %v120 = vcombine.high %v112, %v112
    %v121 = vcombine.high %v119, %v119
    %126 = vmatprep.subr.mxu0 0.0
    %127 = vmatpush1.msra.mxu0 %v48
    %128 = vmatprep.subr.mxu0 0.0
    %129 = vmatpush1.msra.mxu0 %v47
    %130 = vmatprep.subr.mxu0 0.0
    %131 = vmatpush1.msra.mxu0 %v46
    %132 = vmatprep.subr.mxu0 0.0
    %133 = vmatpush1.msra.mxu0 %v45
    %134 = vmatprep.subr.mxu0 0.0
    %135 = vmatpush1.msra.mxu0 %v44
    %136 = vmatprep.subr.mxu0 0.0
    %137 = vmatpush1.msra.mxu0 %v43
    %138 = vmatprep.subr.mxu0 0.0
    %139 = vmatpush1.msra.mxu0 %v42
    %140 = vmatprep.subr.mxu0 0.0
    %141 = vmatpush1.msra.mxu0 %v41
    %142 = vmatprep.subr.mxu0 0.0
    %143 = vmatpush1.msra.mxu0 %v40
    %144 = vmatprep.subr.mxu0 0.0
    %145 = vmatpush1.msra.mxu0 %v39
    %146 = vmatprep.subr.mxu0 0.0
    %147 = vmatpush1.msra.mxu0 %v38
    %148 = vmatprep.subr.mxu0 0.0
    %149 = vmatpush1.msra.mxu0 %v37
    %150 = vmatprep.subr.mxu0 0.0
    %151 = vmatpush1.msra.mxu0 %v36
    %152 = vmatprep.subr.mxu0 0.0
    %153 = vmatpush1.msra.mxu0 %v35
    %154 = vmatprep.subr.mxu0 0.0
    %155 = vmatpush1.msra.mxu0 %v34
    %156 = vmatprep.subr.mxu0 0.0
    %157 = vmatpush1.msra.mxu0 %v33
    %158 = vmatprep.subr.mxu0 0.0
    %159 = vmatpush2.msra.mxu0 %v64
    %160 = vmatprep.subr.mxu0 0.0
    %161 = vmatpush2.msra.mxu0 %v63
    %162 = vmatprep.subr.mxu0 0.0
    %163 = vmatpush2.msra.mxu0 %v62
    %164 = vmatprep.subr.mxu0 0.0
    %165 = vmatpush2.msra.mxu0 %v61
    %166 = vmatprep.subr.mxu0 0.0
    %167 = vmatpush2.msra.mxu0 %v60
    %168 = vmatprep.subr.mxu0 0.0
    %169 = vmatpush2.msra.mxu0 %v59
    %170 = vmatprep.subr.mxu0 0.0
    %171 = vmatpush2.msra.mxu0 %v58
    %172 = vmatprep.subr.mxu0 0.0
    %173 = vmatpush2.msra.mxu0 %v57
    %174 = vmatprep.subr.mxu0 0.0
    %175 = vmatpush2.msra.mxu0 %v56
    %176 = vmatprep.subr.mxu0 0.0
    %177 = vmatpush2.msra.mxu0 %v55
    %178 = vmatprep.subr.mxu0 0.0
    %179 = vmatpush2.msra.mxu0 %v54
    %180 = vmatprep.subr.mxu0 0.0
    %181 = vmatpush2.msra.mxu0 %v53
    %182 = vmatprep.subr.mxu0 0.0
    %183 = vmatpush2.msra.mxu0 %v52
    %184 = vmatprep.subr.mxu0 0.0
    %185 = vmatpush2.msra.mxu0 %v51
    %186 = vmatprep.subr.mxu0 0.0
    %187 = vmatpush2.msra.mxu0 %v50
    %188 = vmatprep.subr.mxu0 0.0
    %189 = vmatpush2.msra.mxu0 %v49
    %190 = vmatprep.mubr.f32.mxu0 %v120
    %191 = vmatmul.mubr.f32.gmra.mxu0 %v112
    %v192 = vpop.f32.mrf.mxu0
    %v193 = vadd.f32 %v102, %v192
    %v194 = vpop.f32.mrf.mxu0
    %195 = vdwg.mxu0
    %196 = vmatprep.subr.mxu0 0.0
    %197 = vmatpush1.msra.mxu0 %v80
    %198 = vmatprep.subr.mxu0 0.0
    %199 = vmatpush1.msra.mxu0 %v79
    %200 = vmatprep.subr.mxu0 0.0
    %201 = vmatpush1.msra.mxu0 %v78
    %202 = vmatprep.subr.mxu0 0.0
    %203 = vmatpush1.msra.mxu0 %v77
    %204 = vmatprep.subr.mxu0 0.0
    %205 = vmatpush1.msra.mxu0 %v76
    %206 = vmatprep.subr.mxu0 0.0
    %207 = vmatpush1.msra.mxu0 %v75
    %208 = vmatprep.subr.mxu0 0.0
    %209 = vmatpush1.msra.mxu0 %v74
    %210 = vmatprep.subr.mxu0 0.0
    %211 = vmatpush1.msra.mxu0 %v73
    %212 = vmatprep.subr.mxu0 0.0
    %213 = vmatpush1.msra.mxu0 %v72
    %214 = vmatprep.subr.mxu0 0.0
    %215 = vmatpush1.msra.mxu0 %v71
    %216 = vmatprep.subr.mxu0 0.0
    %217 = vmatpush1.msra.mxu0 %v70
    %218 = vmatprep.subr.mxu0 0.0
    %219 = vmatpush1.msra.mxu0 %v69
    %220 = vmatprep.subr.mxu0 0.0
    %221 = vmatpush1.msra.mxu0 %v68
    %222 = vmatprep.subr.mxu0 0.0
    %223 = vmatpush1.msra.mxu0 %v67
    %224 = vmatprep.subr.mxu0 0.0
    %225 = vmatpush1.msra.mxu0 %v66
    %226 = vmatprep.subr.mxu0 0.0
    %227 = vmatpush1.msra.mxu0 %v65
    %228 = vmatprep.subr.mxu0 0.0
    %229 = vmatpush2.msra.mxu0 %v96
    %230 = vmatprep.subr.mxu0 0.0
    %231 = vmatpush2.msra.mxu0 %v95
    %232 = vmatprep.subr.mxu0 0.0
    %233 = vmatpush2.msra.mxu0 %v94
    %234 = vmatprep.subr.mxu0 0.0
    %235 = vmatpush2.msra.mxu0 %v93
    %236 = vmatprep.subr.mxu0 0.0
    %237 = vmatpush2.msra.mxu0 %v92
    %238 = vmatprep.subr.mxu0 0.0
    %239 = vmatpush2.msra.mxu0 %v91
    %240 = vmatprep.subr.mxu0 0.0
    %241 = vmatpush2.msra.mxu0 %v90
    %242 = vmatprep.subr.mxu0 0.0
    %243 = vmatpush2.msra.mxu0 %v89
    %244 = vmatprep.subr.mxu0 0.0
    %245 = vmatpush2.msra.mxu0 %v88
    %246 = vmatprep.subr.mxu0 0.0
    %247 = vmatpush2.msra.mxu0 %v87
    %248 = vmatprep.subr.mxu0 0.0
    %249 = vmatpush2.msra.mxu0 %v86
    %250 = vmatprep.subr.mxu0 0.0
    %251 = vmatpush2.msra.mxu0 %v85
    %252 = vmatprep.subr.mxu0 0.0
    %253 = vmatpush2.msra.mxu0 %v84
    %254 = vmatprep.subr.mxu0 0.0
    %255 = vmatpush2.msra.mxu0 %v83
    %256 = vmatprep.subr.mxu0 0.0
    %257 = vmatpush2.msra.mxu0 %v82
    %258 = vmatprep.subr.mxu0 0.0
    %259 = vmatpush2.msra.mxu0 %v81
    %260 = vmatprep.mubr.f32.mxu0 %v121
    %261 = vmatmul.mubr.f32.gmra.mxu0 %v119
    %v262 = vpop.f32.mrf.mxu0
    %v263 = vadd.f32 %v193, %v262
    %v264 = vpop.f32.mrf.mxu0
    %265 = vdwg.mxu0
    %v266 = vmax.f32 %v263, 0.0
    %vm267 = vcmask 254976
    %268 = vst.msk [vmem:[%s8] sm:$0x3] %vm267, %v266
    %v269 = vld [vmem:[%s3] sm:$0xff]
    %v270 = vld [vmem:[%s3 + $0x8] sm:$0xff]
    %v271 = vlaneseq
    %v272 = vand.u32 %v271, 127
    %273 = vset.pattern.permute.xlu0 0
    %274 = vperm.xlu0 %273, %v269
    %v275 = vpop.permute.xlu0 %274
    %276 = vset.pattern.permute.xlu0 0
    %277 = vperm.xlu0 %276, %v270
    %v278 = vpop.permute.xlu0 %277
    %vm279 = vcmp.eq.s32.totalorder %v275, %v272
    %vm280 = vcmp.eq.s32.totalorder %v278, %v272
    %v281 = vsel %vm279, 1, 0
    %v282 = vsel %vm280, 1, 0
    %v283 = vcvt.s32.f32 %v281
    %v284 = vcvt.s32.f32 %v282
    %v285 = vld [vmem:[%s4] sm:$0xff]
    %v286 = vld [vmem:[%s4 + $0x8] sm:$0xff]
    %v287 = vld [vmem:[%s4 + $0x10] sm:$0xff]
    %v288 = vld [vmem:[%s4 + $0x18] sm:$0xff]
    %v289 = vld [vmem:[%s4 + $0x20] sm:$0xff]
    %v290 = vld [vmem:[%s4 + $0x28] sm:$0xff]
    %v291 = vld [vmem:[%s4 + $0x30] sm:$0x3]
    %v292 = vld [vmem:[%s5] sm:$0x1]
    %v294 = vlaneseq
    %v295 = vshrl.u32 %v294, 7
    %v296 = vsub.s32 0, %v295
    %v297 = vrot.slane %v292, %v296
    %vm299 = vcmask 408576
    %v301 = vsel %vm299, %v283, 0
    %v304 = vsel %vm299, %v284, 0
    %vm306 = vcmask 1041408
    %v308 = vsel %vm306, %v291, 0
    %310 = vmatprep.subr.mxu0 0.0
    %311 = vmatpush1.msra.mxu0 0.0
    %312 = vmatprep.subr.mxu0 0.0
    %313 = vmatpush1.msra.mxu0 0.0
    %314 = vmatprep.subr.mxu0 0.0
    %315 = vmatpush1.msra.mxu0 0.0
    %316 = vmatprep.subr.mxu0 0.0
    %317 = vmatpush1.msra.mxu0 0.0
    %318 = vmatprep.subr.mxu0 0.0
    %319 = vmatpush1.msra.mxu0 0.0
    %320 = vmatprep.subr.mxu0 0.0
    %321 = vmatpush1.msra.mxu0 0.0
    %322 = vmatprep.subr.mxu0 0.0
    %323 = vmatpush1.msra.mxu0 0.0
    %324 = vmatprep.subr.mxu0 0.0
    %325 = vmatpush1.msra.mxu0 0.0
    %326 = vmatprep.subr.mxu0 0.0
    %327 = vmatpush1.msra.mxu0 0.0
    %328 = vmatprep.subr.mxu0 0.0
    %329 = vmatpush1.msra.mxu0 %v308
    %330 = vmatprep.subr.mxu0 0.0
    %331 = vmatpush1.msra.mxu0 %v290
    %332 = vmatprep.subr.mxu0 0.0
    %333 = vmatpush1.msra.mxu0 %v289
    %334 = vmatprep.subr.mxu0 0.0
    %335 = vmatpush1.msra.mxu0 %v288
    %336 = vmatprep.subr.mxu0 0.0
    %337 = vmatpush1.msra.mxu0 %v287
    %338 = vmatprep.subr.mxu0 0.0
    %339 = vmatpush1.msra.mxu0 %v286
    %340 = vmatprep.subr.mxu0 0.0
    %341 = vmatpush1.msra.mxu0 %v285
    %342 = vmatprep.subr.mxu0 0.0
    %343 = vmatpush2.msra.mxu0 0.0
    %344 = vmatprep.subr.mxu0 0.0
    %345 = vmatpush2.msra.mxu0 0.0
    %346 = vmatprep.subr.mxu0 0.0
    %347 = vmatpush2.msra.mxu0 0.0
    %348 = vmatprep.subr.mxu0 0.0
    %349 = vmatpush2.msra.mxu0 0.0
    %350 = vmatprep.subr.mxu0 0.0
    %351 = vmatpush2.msra.mxu0 0.0
    %352 = vmatprep.subr.mxu0 0.0
    %353 = vmatpush2.msra.mxu0 0.0
    %354 = vmatprep.subr.mxu0 0.0
    %355 = vmatpush2.msra.mxu0 0.0
    %356 = vmatprep.subr.mxu0 0.0
    %357 = vmatpush2.msra.mxu0 0.0
    %358 = vmatprep.subr.mxu0 0.0
    %359 = vmatpush2.msra.mxu0 0.0
    %360 = vmatprep.subr.mxu0 0.0
    %361 = vmatpush2.msra.mxu0 0.0
    %362 = vmatprep.subr.mxu0 0.0
    %363 = vmatpush2.msra.mxu0 0.0
    %364 = vmatprep.subr.mxu0 0.0
    %365 = vmatpush2.msra.mxu0 0.0
    %366 = vmatprep.subr.mxu0 0.0
    %367 = vmatpush2.msra.mxu0 0.0
    %368 = vmatprep.subr.mxu0 0.0
    %369 = vmatpush2.msra.mxu0 0.0
    %370 = vmatprep.subr.mxu0 0.0
    %371 = vmatpush2.msra.mxu0 0.0
    %372 = vmatprep.subr.mxu0 0.0
    %373 = vmatpush2.msra.mxu0 0.0
    %374 = vmatprep.mubr.f32.mxu0 0.0
    %375 = vmatmul.mubr.f32.gmra.mxu0 %v301
    %v376 = vpop.f32.mrf.mxu0
    %v377 = vadd.f32 %v297, %v376
    %v378 = vpop.f32.mrf.mxu0
    %379 = vmatprep.mubr.f32.mxu0 0.0
    %380 = vmatmul.mubr.f32.gmra.mxu0 %v304
    %v381 = vpop.f32.mrf.mxu0
    %v382 = vadd.f32 %v297, %v381
    %v383 = vpop.f32.mrf.mxu0
    %384 = vdwg.mxu0
    %v385 = vld [vmem:[%s6] sm:$0xff]
    %v386 = vld [vmem:[%s6 + $0x8] sm:$0xff]
    %v387 = vld [vmem:[%s6 + $0x10] sm:$0xff]
    %v388 = vld [vmem:[%s6 + $0x18] sm:$0xff]
    %v389 = vld [vmem:[%s7] sm:$0x1]
    %vm390 = vcmask 261120
    %v392 = vsel %vm390, 0.0, 0
    %394 = vmatprep.subr.mxu0 0.0
    %395 = vmatpush1.msra.mxu0 0.0
    %396 = vmatprep.subr.mxu0 0.0
    %397 = vmatpush1.msra.mxu0 0.0
    %398 = vmatprep.subr.mxu0 0.0
    %399 = vmatpush1.msra.mxu0 0.0
    %400 = vmatprep.subr.mxu0 0.0
    %401 = vmatpush1.msra.mxu0 0.0
    %402 = vmatprep.subr.mxu0 0.0
    %403 = vmatpush1.msra.mxu0 0.0
    %404 = vmatprep.subr.mxu0 0.0
    %405 = vmatpush1.msra.mxu0 0.0
    %406 = vmatprep.subr.mxu0 0.0
    %407 = vmatpush1.msra.mxu0 0.0
    %408 = vmatprep.subr.mxu0 0.0
    %409 = vmatpush1.msra.mxu0 0.0
    %410 = vmatprep.subr.mxu0 0.0
    %411 = vmatpush1.msra.mxu0 0.0
    %412 = vmatprep.subr.mxu0 0.0
    %413 = vmatpush1.msra.mxu0 0.0
    %414 = vmatprep.subr.mxu0 0.0
    %415 = vmatpush1.msra.mxu0 0.0
    %416 = vmatprep.subr.mxu0 0.0
    %417 = vmatpush1.msra.mxu0 0.0
    %418 = vmatprep.subr.mxu0 0.0
    %419 = vmatpush1.msra.mxu0 %v388
    %420 = vmatprep.subr.mxu0 0.0
    %421 = vmatpush1.msra.mxu0 %v387
    %422 = vmatprep.subr.mxu0 0.0
    %423 = vmatpush1.msra.mxu0 %v386
    %424 = vmatprep.subr.mxu0 0.0
    %425 = vmatpush1.msra.mxu0 %v385
    %426 = vmatprep.subr.mxu0 0.0
    %427 = vmatpush2.msra.mxu0 0.0
    %428 = vmatprep.subr.mxu0 0.0
    %429 = vmatpush2.msra.mxu0 0.0
    %430 = vmatprep.subr.mxu0 0.0
    %431 = vmatpush2.msra.mxu0 0.0
    %432 = vmatprep.subr.mxu0 0.0
    %433 = vmatpush2.msra.mxu0 0.0
    %434 = vmatprep.subr.mxu0 0.0
    %435 = vmatpush2.msra.mxu0 0.0
    %436 = vmatprep.subr.mxu0 0.0
    %437 = vmatpush2.msra.mxu0 0.0
    %438 = vmatprep.subr.mxu0 0.0
    %439 = vmatpush2.msra.mxu0 0.0
    %440 = vmatprep.subr.mxu0 0.0
    %441 = vmatpush2.msra.mxu0 0.0
    %442 = vmatprep.subr.mxu0 0.0
    %443 = vmatpush2.msra.mxu0 0.0
    %444 = vmatprep.subr.mxu0 0.0
    %445 = vmatpush2.msra.mxu0 0.0
    %446 = vmatprep.subr.mxu0 0.0
    %447 = vmatpush2.msra.mxu0 0.0
    %448 = vmatprep.subr.mxu0 0.0
    %449 = vmatpush2.msra.mxu0 0.0
    %450 = vmatprep.subr.mxu0 0.0
    %451 = vmatpush2.msra.mxu0 0.0
    %452 = vmatprep.subr.mxu0 0.0
    %453 = vmatpush2.msra.mxu0 0.0
    %454 = vmatprep.subr.mxu0 0.0
    %455 = vmatpush2.msra.mxu0 0.0
    %456 = vmatprep.subr.mxu0 0.0
    %457 = vmatpush2.msra.mxu0 0.0
    %458 = vmatprep.mubr.f32.mxu0 0.0
    %459 = vmatmul.mubr.f32.gmra.mxu0 %v392
    %v460 = vpop.f32.mrf.mxu0
    %v461 = vadd.f32 0.0, %v460
    %v462 = vpop.f32.mrf.mxu0
    %463 = vdwg.mxu0
    %v464 = vadd.f32 %v377, %v461
    %v465 = vxor.u32 %v464, 2147483648
    %v466 = vmul.f32 %v465, 1.442695
    %v467 = vpow.pop %v466
    %v468 = vadd.f32 %v467, 1.0
    %v469 = vrcp.pop %v468
    %v470 = vmul.f32 1.0, %v469
    %v472 = vlaneseq
    %v473 = vshrl.u32 %v472, 7
    %v474 = vsub.s32 0, %v473
    %v475 = vrot.slane %v389, %v474
    %476 = vrot.lane.b32.xlu0 %v475, 64
    %v477 = vpop.permute.xlu0 %476
    %v479 = vadd.f32 %v461, %v477
    %481 = vrot.lane.b32.xlu0 %v479, 64
    %v482 = vpop.permute.xlu0 %481
    %v484 = vmul.f32 %v470, %v482
    %486 = vrot.lane.b32.xlu0 %v484, 64
    %v487 = vpop.permute.xlu0 %486
    %v489 = vadd.f32 %v377, %v487
    %v490 = vtanh.pop %v489
    %v491 = vsub.f32 1.0, %v470
    %493 = vrot.lane.b32.xlu0 %v490, 96
    %v494 = vpop.permute.xlu0 %493
    %v496 = vmul.f32 %v491, %v494
    %v497 = vmul.f32 %v470, 0.0
    %v498 = vadd.f32 %v496, %v497
    %500 = vrot.lane.b32.xlu0 %v498, 96
    %v501 = vpop.permute.xlu0 %500
    %v502 = vsel %vm390, %v501, 0
    %504 = vmatprep.subr.mxu0 0.0
    %505 = vmatpush1.msra.mxu0 0.0
    %506 = vmatprep.subr.mxu0 0.0
    %507 = vmatpush1.msra.mxu0 0.0
    %508 = vmatprep.subr.mxu0 0.0
    %509 = vmatpush1.msra.mxu0 0.0
    %510 = vmatprep.subr.mxu0 0.0
    %511 = vmatpush1.msra.mxu0 0.0
    %512 = vmatprep.subr.mxu0 0.0
    %513 = vmatpush1.msra.mxu0 0.0
    %514 = vmatprep.subr.mxu0 0.0
    %515 = vmatpush1.msra.mxu0 0.0
    %516 = vmatprep.subr.mxu0 0.0
    %517 = vmatpush1.msra.mxu0 0.0
    %518 = vmatprep.subr.mxu0 0.0
    %519 = vmatpush1.msra.mxu0 0.0
    %520 = vmatprep.subr.mxu0 0.0
    %521 = vmatpush1.msra.mxu0 0.0
    %522 = vmatprep.subr.mxu0 0.0
    %523 = vmatpush1.msra.mxu0 0.0
    %524 = vmatprep.subr.mxu0 0.0
    %525 = vmatpush1.msra.mxu0 0.0
    %526 = vmatprep.subr.mxu0 0.0
    %527 = vmatpush1.msra.mxu0 0.0
    %528 = vmatprep.subr.mxu0 0.0
    %529 = vmatpush1.msra.mxu0 %v388
    %530 = vmatprep.subr.mxu0 0.0
    %531 = vmatpush1.msra.mxu0 %v387
    %532 = vmatprep.subr.mxu0 0.0
    %533 = vmatpush1.msra.mxu0 %v386
    %534 = vmatprep.subr.mxu0 0.0
    %535 = vmatpush1.msra.mxu0 %v385
    %536 = vmatprep.subr.mxu0 0.0
    %537 = vmatpush2.msra.mxu0 0.0
    %538 = vmatprep.subr.mxu0 0.0
    %539 = vmatpush2.msra.mxu0 0.0
    %540 = vmatprep.subr.mxu0 0.0
    %541 = vmatpush2.msra.mxu0 0.0
    %542 = vmatprep.subr.mxu0 0.0
    %543 = vmatpush2.msra.mxu0 0.0
    %544 = vmatprep.subr.mxu0 0.0
    %545 = vmatpush2.msra.mxu0 0.0
    %546 = vmatprep.subr.mxu0 0.0
    %547 = vmatpush2.msra.mxu0 0.0
    %548 = vmatprep.subr.mxu0 0.0
    %549 = vmatpush2.msra.mxu0 0.0
    %550 = vmatprep.subr.mxu0 0.0
    %551 = vmatpush2.msra.mxu0 0.0
    %552 = vmatprep.subr.mxu0 0.0
    %553 = vmatpush2.msra.mxu0 0.0
    %554 = vmatprep.subr.mxu0 0.0
    %555 = vmatpush2.msra.mxu0 0.0
    %556 = vmatprep.subr.mxu0 0.0
    %557 = vmatpush2.msra.mxu0 0.0
    %558 = vmatprep.subr.mxu0 0.0
    %559 = vmatpush2.msra.mxu0 0.0
    %560 = vmatprep.subr.mxu0 0.0
    %561 = vmatpush2.msra.mxu0 0.0
    %562 = vmatprep.subr.mxu0 0.0
    %563 = vmatpush2.msra.mxu0 0.0
    %564 = vmatprep.subr.mxu0 0.0
    %565 = vmatpush2.msra.mxu0 0.0
    %566 = vmatprep.subr.mxu0 0.0
    %567 = vmatpush2.msra.mxu0 0.0
    %568 = vmatprep.mubr.f32.mxu0 0.0
    %569 = vmatmul.mubr.f32.gmra.mxu0 %v502
    %v570 = vpop.f32.mrf.mxu0
    %v571 = vadd.f32 0.0, %v570
    %v572 = vpop.f32.mrf.mxu0
    %573 = vdwg.mxu0
    %v575 = vrot.slane %v571, 6
    %v577 = vadd.f32 %v377, %v575
    %v578 = vxor.u32 %v577, 2147483648
    %v579 = vmul.f32 %v578, 1.442695
    %v580 = vpow.pop %v579
    %v581 = vadd.f32 %v580, 1.0
    %v582 = vrcp.pop %v581
    %v583 = vmul.f32 1.0, %v582
    %v584 = vadd.f32 %v571, %v477
    %v586 = vrot.slane %v584, 6
    %587 = vrot.lane.b32.xlu0 %v586, 64
    %v588 = vpop.permute.xlu0 %587
    %v590 = vmul.f32 %v583, %v588
    %592 = vrot.lane.b32.xlu0 %v590, 64
    %v593 = vpop.permute.xlu0 %592
    %v595 = vadd.f32 %v377, %v593
    %v596 = vtanh.pop %v595
    %v597 = vsub.f32 1.0, %v583
    %599 = vrot.lane.b32.xlu0 %v596, 96
    %v600 = vpop.permute.xlu0 %599
    %v602 = vmul.f32 %v597, %v600
    %v603 = vrot.slane %v498, 6
    %v605 = vmul.f32 %v583, %v603
    %v606 = vadd.f32 %v602, %v605
    %v608 = vrot.slane %v606, 2
    %609 = vrot.lane.b32.xlu0 %v608, 96
    %v610 = vpop.permute.xlu0 %609
    %v611 = vsel %vm390, %v610, 0
    %613 = vmatprep.subr.mxu0 0.0
    %614 = vmatpush1.msra.mxu0 0.0
    %615 = vmatprep.subr.mxu0 0.0
    %616 = vmatpush1.msra.mxu0 0.0
    %617 = vmatprep.subr.mxu0 0.0
    %618 = vmatpush1.msra.mxu0 0.0
    %619 = vmatprep.subr.mxu0 0.0
    %620 = vmatpush1.msra.mxu0 0.0
    %621 = vmatprep.subr.mxu0 0.0
    %622 = vmatpush1.msra.mxu0 0.0
    %623 = vmatprep.subr.mxu0 0.0
    %624 = vmatpush1.msra.mxu0 0.0
    %625 = vmatprep.subr.mxu0 0.0
    %626 = vmatpush1.msra.mxu0 0.0
    %627 = vmatprep.subr.mxu0 0.0
    %628 = vmatpush1.msra.mxu0 0.0
    %629 = vmatprep.subr.mxu0 0.0
    %630 = vmatpush1.msra.mxu0 0.0
    %631 = vmatprep.subr.mxu0 0.0
    %632 = vmatpush1.msra.mxu0 0.0
    %633 = vmatprep.subr.mxu0 0.0
    %634 = vmatpush1.msra.mxu0 0.0
    %635 = vmatprep.subr.mxu0 0.0
    %636 = vmatpush1.msra.mxu0 0.0
    %637 = vmatprep.subr.mxu0 0.0
    %638 = vmatpush1.msra.mxu0 %v388
    %639 = vmatprep.subr.mxu0 0.0
    %640 = vmatpush1.msra.mxu0 %v387
    %641 = vmatprep.subr.mxu0 0.0
    %642 = vmatpush1.msra.mxu0 %v386
    %643 = vmatprep.subr.mxu0 0.0
    %644 = vmatpush1.msra.mxu0 %v385
    %645 = vmatprep.subr.mxu0 0.0
    %646 = vmatpush2.msra.mxu0 0.0
    %647 = vmatprep.subr.mxu0 0.0
    %648 = vmatpush2.msra.mxu0 0.0
    %649 = vmatprep.subr.mxu0 0.0
    %650 = vmatpush2.msra.mxu0 0.0
    %651 = vmatprep.subr.mxu0 0.0
    %652 = vmatpush2.msra.mxu0 0.0
    %653 = vmatprep.subr.mxu0 0.0
    %654 = vmatpush2.msra.mxu0 0.0
    %655 = vmatprep.subr.mxu0 0.0
    %656 = vmatpush2.msra.mxu0 0.0
    %657 = vmatprep.subr.mxu0 0.0
    %658 = vmatpush2.msra.mxu0 0.0
    %659 = vmatprep.subr.mxu0 0.0
    %660 = vmatpush2.msra.mxu0 0.0
    %661 = vmatprep.subr.mxu0 0.0
    %662 = vmatpush2.msra.mxu0 0.0
    %663 = vmatprep.subr.mxu0 0.0
    %664 = vmatpush2.msra.mxu0 0.0
    %665 = vmatprep.subr.mxu0 0.0
    %666 = vmatpush2.msra.mxu0 0.0
    %667 = vmatprep.subr.mxu0 0.0
    %668 = vmatpush2.msra.mxu0 0.0
    %669 = vmatprep.subr.mxu0 0.0
    %670 = vmatpush2.msra.mxu0 0.0
    %671 = vmatprep.subr.mxu0 0.0
    %672 = vmatpush2.msra.mxu0 0.0
    %673 = vmatprep.subr.mxu0 0.0
    %674 = vmatpush2.msra.mxu0 0.0
    %675 = vmatprep.subr.mxu0 0.0
    %676 = vmatpush2.msra.mxu0 0.0
    %677 = vmatprep.mubr.f32.mxu0 0.0
    %678 = vmatmul.mubr.f32.gmra.mxu0 %v611
    %v679 = vpop.f32.mrf.mxu0
    %v680 = vadd.f32 0.0, %v679
    %v681 = vpop.f32.mrf.mxu0
    %682 = vdwg.mxu0
    %v684 = vrot.slane %v680, 4
    %v686 = vadd.f32 %v377, %v684
    %v687 = vxor.u32 %v686, 2147483648
    %v688 = vmul.f32 %v687, 1.442695
    %v689 = vpow.pop %v688
    %v690 = vadd.f32 %v689, 1.0
    %v691 = vrcp.pop %v690
    %v692 = vmul.f32 1.0, %v691
    %v693 = vadd.f32 %v680, %v477
    %v695 = vrot.slane %v693, 4
    %696 = vrot.lane.b32.xlu0 %v695, 64
    %v697 = vpop.permute.xlu0 %696
    %v699 = vmul.f32 %v692, %v697
    %701 = vrot.lane.b32.xlu0 %v699, 64
    %v702 = vpop.permute.xlu0 %701
    %v704 = vadd.f32 %v377, %v702
    %v705 = vtanh.pop %v704
    %v706 = vsub.f32 1.0, %v692
    %708 = vrot.lane.b32.xlu0 %v705, 96
    %v709 = vpop.permute.xlu0 %708
    %v711 = vmul.f32 %v706, %v709
    %v712 = vrot.slane %v606, 6
    %v714 = vmul.f32 %v692, %v712
    %v715 = vadd.f32 %v711, %v714
    %v717 = vrot.slane %v715, 4
    %718 = vrot.lane.b32.xlu0 %v717, 96
    %v719 = vpop.permute.xlu0 %718
    %v720 = vsel %vm390, %v719, 0
    %722 = vmatprep.subr.mxu0 0.0
    %723 = vmatpush1.msra.mxu0 0.0
    %724 = vmatprep.subr.mxu0 0.0
    %725 = vmatpush1.msra.mxu0 0.0
    %726 = vmatprep.subr.mxu0 0.0
    %727 = vmatpush1.msra.mxu0 0.0
    %728 = vmatprep.subr.mxu0 0.0
    %729 = vmatpush1.msra.mxu0 0.0
    %730 = vmatprep.subr.mxu0 0.0
    %731 = vmatpush1.msra.mxu0 0.0
    %732 = vmatprep.subr.mxu0 0.0
    %733 = vmatpush1.msra.mxu0 0.0
    %734 = vmatprep.subr.mxu0 0.0
    %735 = vmatpush1.msra.mxu0 0.0
    %736 = vmatprep.subr.mxu0 0.0
    %737 = vmatpush1.msra.mxu0 0.0
    %738 = vmatprep.subr.mxu0 0.0
    %739 = vmatpush1.msra.mxu0 0.0
    %740 = vmatprep.subr.mxu0 0.0
    %741 = vmatpush1.msra.mxu0 0.0
    %742 = vmatprep.subr.mxu0 0.0
    %743 = vmatpush1.msra.mxu0 0.0
    %744 = vmatprep.subr.mxu0 0.0
    %745 = vmatpush1.msra.mxu0 0.0
    %746 = vmatprep.subr.mxu0 0.0
    %747 = vmatpush1.msra.mxu0 %v388
    %748 = vmatprep.subr.mxu0 0.0
    %749 = vmatpush1.msra.mxu0 %v387
    %750 = vmatprep.subr.mxu0 0.0
    %751 = vmatpush1.msra.mxu0 %v386
    %752 = vmatprep.subr.mxu0 0.0
    %753 = vmatpush1.msra.mxu0 %v385
    %754 = vmatprep.subr.mxu0 0.0
    %755 = vmatpush2.msra.mxu0 0.0
    %756 = vmatprep.subr.mxu0 0.0
    %757 = vmatpush2.msra.mxu0 0.0
    %758 = vmatprep.subr.mxu0 0.0
    %759 = vmatpush2.msra.mxu0 0.0
    %760 = vmatprep.subr.mxu0 0.0
    %761 = vmatpush2.msra.mxu0 0.0
    %762 = vmatprep.subr.mxu0 0.0
    %763 = vmatpush2.msra.mxu0 0.0
    %764 = vmatprep.subr.mxu0 0.0
    %765 = vmatpush2.msra.mxu0 0.0
    %766 = vmatprep.subr.mxu0 0.0
    %767 = vmatpush2.msra.mxu0 0.0
    %768 = vmatprep.subr.mxu0 0.0
    %769 = vmatpush2.msra.mxu0 0.0
    %770 = vmatprep.subr.mxu0 0.0
    %771 = vmatpush2.msra.mxu0 0.0
    %772 = vmatprep.subr.mxu0 0.0
    %773 = vmatpush2.msra.mxu0 0.0
    %774 = vmatprep.subr.mxu0 0.0
    %775 = vmatpush2.msra.mxu0 0.0
    %776 = vmatprep.subr.mxu0 0.0
    %777 = vmatpush2.msra.mxu0 0.0
    %778 = vmatprep.subr.mxu0 0.0
    %779 = vmatpush2.msra.mxu0 0.0
    %780 = vmatprep.subr.mxu0 0.0
    %781 = vmatpush2.msra.mxu0 0.0
    %782 = vmatprep.subr.mxu0 0.0
    %783 = vmatpush2.msra.mxu0 0.0
    %784 = vmatprep.subr.mxu0 0.0
    %785 = vmatpush2.msra.mxu0 0.0
    %786 = vmatprep.mubr.f32.mxu0 0.0
    %787 = vmatmul.mubr.f32.gmra.mxu0 %v720
    %v788 = vpop.f32.mrf.mxu0
    %v789 = vadd.f32 0.0, %v788
    %v790 = vpop.f32.mrf.mxu0
    %791 = vdwg.mxu0
    %v793 = vrot.slane %v789, 2
    %v795 = vadd.f32 %v377, %v793
    %v796 = vxor.u32 %v795, 2147483648
    %v797 = vmul.f32 %v796, 1.442695
    %v798 = vpow.pop %v797
    %v799 = vadd.f32 %v798, 1.0
    %v800 = vrcp.pop %v799
    %v801 = vmul.f32 1.0, %v800
    %v802 = vadd.f32 %v789, %v477
    %v804 = vrot.slane %v802, 2
    %805 = vrot.lane.b32.xlu0 %v804, 64
    %v806 = vpop.permute.xlu0 %805
    %v808 = vmul.f32 %v801, %v806
    %810 = vrot.lane.b32.xlu0 %v808, 64
    %v811 = vpop.permute.xlu0 %810
    %v813 = vadd.f32 %v377, %v811
    %v814 = vtanh.pop %v813
    %v815 = vsub.f32 1.0, %v801
    %817 = vrot.lane.b32.xlu0 %v814, 96
    %v818 = vpop.permute.xlu0 %817
    %v820 = vmul.f32 %v815, %v818
    %v821 = vrot.slane %v715, 6
    %v823 = vmul.f32 %v801, %v821
    %v824 = vadd.f32 %v820, %v823
    %v826 = vrot.slane %v824, 6
    %827 = vrot.lane.b32.xlu0 %v826, 96
    %v828 = vpop.permute.xlu0 %827
    %v829 = vsel %vm390, %v828, 0
    %831 = vmatprep.subr.mxu0 0.0
    %832 = vmatpush1.msra.mxu0 0.0
    %833 = vmatprep.subr.mxu0 0.0
    %834 = vmatpush1.msra.mxu0 0.0
    %835 = vmatprep.subr.mxu0 0.0
    %836 = vmatpush1.msra.mxu0 0.0
    %837 = vmatprep.subr.mxu0 0.0
    %838 = vmatpush1.msra.mxu0 0.0
    %839 = vmatprep.subr.mxu0 0.0
    %840 = vmatpush1.msra.mxu0 0.0
    %841 = vmatprep.subr.mxu0 0.0
    %842 = vmatpush1.msra.mxu0 0.0
    %843 = vmatprep.subr.mxu0 0.0
    %844 = vmatpush1.msra.mxu0 0.0
    %845 = vmatprep.subr.mxu0 0.0
    %846 = vmatpush1.msra.mxu0 0.0
    %847 = vmatprep.subr.mxu0 0.0
    %848 = vmatpush1.msra.mxu0 0.0
    %849 = vmatprep.subr.mxu0 0.0
    %850 = vmatpush1.msra.mxu0 0.0
    %851 = vmatprep.subr.mxu0 0.0
    %852 = vmatpush1.msra.mxu0 0.0
    %853 = vmatprep.subr.mxu0 0.0
    %854 = vmatpush1.msra.mxu0 0.0
    %855 = vmatprep.subr.mxu0 0.0
    %856 = vmatpush1.msra.mxu0 %v388
    %857 = vmatprep.subr.mxu0 0.0
    %858 = vmatpush1.msra.mxu0 %v387
    %859 = vmatprep.subr.mxu0 0.0
    %860 = vmatpush1.msra.mxu0 %v386
    %861 = vmatprep.subr.mxu0 0.0
    %862 = vmatpush1.msra.mxu0 %v385
    %863 = vmatprep.subr.mxu0 0.0
    %864 = vmatpush2.msra.mxu0 0.0
    %865 = vmatprep.subr.mxu0 0.0
    %866 = vmatpush2.msra.mxu0 0.0
    %867 = vmatprep.subr.mxu0 0.0
    %868 = vmatpush2.msra.mxu0 0.0
    %869 = vmatprep.subr.mxu0 0.0
    %870 = vmatpush2.msra.mxu0 0.0
    %871 = vmatprep.subr.mxu0 0.0
    %872 = vmatpush2.msra.mxu0 0.0
    %873 = vmatprep.subr.mxu0 0.0
    %874 = vmatpush2.msra.mxu0 0.0
    %875 = vmatprep.subr.mxu0 0.0
    %876 = vmatpush2.msra.mxu0 0.0
    %877 = vmatprep.subr.mxu0 0.0
    %878 = vmatpush2.msra.mxu0 0.0
    %879 = vmatprep.subr.mxu0 0.0
    %880 = vmatpush2.msra.mxu0 0.0
    %881 = vmatprep.subr.mxu0 0.0
    %882 = vmatpush2.msra.mxu0 0.0
    %883 = vmatprep.subr.mxu0 0.0
    %884 = vmatpush2.msra.mxu0 0.0
    %885 = vmatprep.subr.mxu0 0.0
    %886 = vmatpush2.msra.mxu0 0.0
    %887 = vmatprep.subr.mxu0 0.0
    %888 = vmatpush2.msra.mxu0 0.0
    %889 = vmatprep.subr.mxu0 0.0
    %890 = vmatpush2.msra.mxu0 0.0
    %891 = vmatprep.subr.mxu0 0.0
    %892 = vmatpush2.msra.mxu0 0.0
    %893 = vmatprep.subr.mxu0 0.0
    %894 = vmatpush2.msra.mxu0 0.0
    %895 = vmatprep.mubr.f32.mxu0 0.0
    %896 = vmatmul.mubr.f32.gmra.mxu0 %v829
    %v897 = vpop.f32.mrf.mxu0
    %v898 = vadd.f32 0.0, %v897
    %v899 = vpop.f32.mrf.mxu0
    %900 = vdwg.mxu0
    %v901 = vadd.f32 %v382, %v898
    %v902 = vxor.u32 %v901, 2147483648
    %v903 = vmul.f32 %v902, 1.442695
    %v904 = vpow.pop %v903
    %v905 = vadd.f32 %v904, 1.0
    %v906 = vrcp.pop %v905
    %v907 = vmul.f32 1.0, %v906
    %v908 = vadd.f32 %v898, %v477
    %910 = vrot.lane.b32.xlu0 %v908, 64
    %v911 = vpop.permute.xlu0 %910
    %v913 = vmul.f32 %v907, %v911
    %915 = vrot.lane.b32.xlu0 %v913, 64
    %v916 = vpop.permute.xlu0 %915
    %v918 = vadd.f32 %v382, %v916
    %v919 = vtanh.pop %v918
    %v920 = vsub.f32 1.0, %v907
    %922 = vrot.lane.b32.xlu0 %v919, 96
    %v923 = vpop.permute.xlu0 %922
    %v925 = vmul.f32 %v920, %v923
    %v927 = vmul.f32 %v907, %v826
    %v928 = vadd.f32 %v925, %v927
    %930 = vrot.lane.b32.xlu0 %v928, 96
    %v931 = vpop.permute.xlu0 %930
    %v932 = vsel %vm390, %v931, 0
    %934 = vmatprep.subr.mxu0 0.0
    %935 = vmatpush1.msra.mxu0 0.0
    %936 = vmatprep.subr.mxu0 0.0
    %937 = vmatpush1.msra.mxu0 0.0
    %938 = vmatprep.subr.mxu0 0.0
    %939 = vmatpush1.msra.mxu0 0.0
    %940 = vmatprep.subr.mxu0 0.0
    %941 = vmatpush1.msra.mxu0 0.0
    %942 = vmatprep.subr.mxu0 0.0
    %943 = vmatpush1.msra.mxu0 0.0
    %944 = vmatprep.subr.mxu0 0.0
    %945 = vmatpush1.msra.mxu0 0.0
    %946 = vmatprep.subr.mxu0 0.0
    %947 = vmatpush1.msra.mxu0 0.0
    %948 = vmatprep.subr.mxu0 0.0
    %949 = vmatpush1.msra.mxu0 0.0
    %950 = vmatprep.subr.mxu0 0.0
    %951 = vmatpush1.msra.mxu0 0.0
    %952 = vmatprep.subr.mxu0 0.0
    %953 = vmatpush1.msra.mxu0 0.0
    %954 = vmatprep.subr.mxu0 0.0
    %955 = vmatpush1.msra.mxu0 0.0
    %956 = vmatprep.subr.mxu0 0.0
    %957 = vmatpush1.msra.mxu0 0.0
    %958 = vmatprep.subr.mxu0 0.0
    %959 = vmatpush1.msra.mxu0 %v388
    %960 = vmatprep.subr.mxu0 0.0
    %961 = vmatpush1.msra.mxu0 %v387
    %962 = vmatprep.subr.mxu0 0.0
    %963 = vmatpush1.msra.mxu0 %v386
    %964 = vmatprep.subr.mxu0 0.0
    %965 = vmatpush1.msra.mxu0 %v385
    %966 = vmatprep.subr.mxu0 0.0
    %967 = vmatpush2.msra.mxu0 0.0
    %968 = vmatprep.subr.mxu0 0.0
    %969 = vmatpush2.msra.mxu0 0.0
    %970 = vmatprep.subr.mxu0 0.0
    %971 = vmatpush2.msra.mxu0 0.0
    %972 = vmatprep.subr.mxu0 0.0
    %973 = vmatpush2.msra.mxu0 0.0
    %974 = vmatprep.subr.mxu0 0.0
    %975 = vmatpush2.msra.mxu0 0.0
    %976 = vmatprep.subr.mxu0 0.0
    %977 = vmatpush2.msra.mxu0 0.0
    %978 = vmatprep.subr.mxu0 0.0
    %979 = vmatpush2.msra.mxu0 0.0
    %980 = vmatprep.subr.mxu0 0.0
    %981 = vmatpush2.msra.mxu0 0.0
    %982 = vmatprep.subr.mxu0 0.0
    %983 = vmatpush2.msra.mxu0 0.0
    %984 = vmatprep.subr.mxu0 0.0
    %985 = vmatpush2.msra.mxu0 0.0
    %986 = vmatprep.subr.mxu0 0.0
    %987 = vmatpush2.msra.mxu0 0.0
    %988 = vmatprep.subr.mxu0 0.0
    %989 = vmatpush2.msra.mxu0 0.0
    %990 = vmatprep.subr.mxu0 0.0
    %991 = vmatpush2.msra.mxu0 0.0
    %992 = vmatprep.subr.mxu0 0.0
    %993 = vmatpush2.msra.mxu0 0.0
    %994 = vmatprep.subr.mxu0 0.0
    %995 = vmatpush2.msra.mxu0 0.0
    %996 = vmatprep.subr.mxu0 0.0
    %997 = vmatpush2.msra.mxu0 0.0
    %998 = vmatprep.mubr.f32.mxu0 0.0
    %999 = vmatmul.mubr.f32.gmra.mxu0 %v932
    %v1000 = vpop.f32.mrf.mxu0
    %v1001 = vadd.f32 0.0, %v1000
    %v1002 = vpop.f32.mrf.mxu0
    %1003 = vdwg.mxu0
    %v1005 = vrot.slane %v1001, 6
    %v1007 = vadd.f32 %v382, %v1005
    %v1008 = vxor.u32 %v1007, 2147483648
    %v1009 = vmul.f32 %v1008, 1.442695
    %v1010 = vpow.pop %v1009
    %v1011 = vadd.f32 %v1010, 1.0
    %v1012 = vrcp.pop %v1011
    %v1013 = vmul.f32 1.0, %v1012
    %v1014 = vadd.f32 %v1001, %v477
    %v1016 = vrot.slane %v1014, 6
    %1017 = vrot.lane.b32.xlu0 %v1016, 64
    %v1018 = vpop.permute.xlu0 %1017
    %v1020 = vmul.f32 %v1013, %v1018
    %1022 = vrot.lane.b32.xlu0 %v1020, 64
    %v1023 = vpop.permute.xlu0 %1022
    %v1025 = vadd.f32 %v382, %v1023
    %v1026 = vtanh.pop %v1025
    %v1027 = vsub.f32 1.0, %v1013
    %1029 = vrot.lane.b32.xlu0 %v1026, 96
    %v1030 = vpop.permute.xlu0 %1029
    %v1032 = vmul.f32 %v1027, %v1030
    %v1033 = vrot.slane %v928, 6
    %v1035 = vmul.f32 %v1013, %v1033
    %v1036 = vadd.f32 %v1032, %v1035
    %v1038 = vrot.slane %v1036, 2
    %1039 = vrot.lane.b32.xlu0 %v1038, 96
    %v1040 = vpop.permute.xlu0 %1039
    %v1041 = vsel %vm390, %v1040, 0
    %1043 = vmatprep.subr.mxu0 0.0
    %1044 = vmatpush1.msra.mxu0 0.0
    %1045 = vmatprep.subr.mxu0 0.0
    %1046 = vmatpush1.msra.mxu0 0.0
    %1047 = vmatprep.subr.mxu0 0.0
    %1048 = vmatpush1.msra.mxu0 0.0
    %1049 = vmatprep.subr.mxu0 0.0
    %1050 = vmatpush1.msra.mxu0 0.0
    %1051 = vmatprep.subr.mxu0 0.0
    %1052 = vmatpush1.msra.mxu0 0.0
    %1053 = vmatprep.subr.mxu0 0.0
    %1054 = vmatpush1.msra.mxu0 0.0
    %1055 = vmatprep.subr.mxu0 0.0
    %1056 = vmatpush1.msra.mxu0 0.0
    %1057 = vmatprep.subr.mxu0 0.0
    %1058 = vmatpush1.msra.mxu0 0.0
    %1059 = vmatprep.subr.mxu0 0.0
    %1060 = vmatpush1.msra.mxu0 0.0
    %1061 = vmatprep.subr.mxu0 0.0
    %1062 = vmatpush1.msra.mxu0 0.0
    %1063 = vmatprep.subr.mxu0 0.0
    %1064 = vmatpush1.msra.mxu0 0.0
    %1065 = vmatprep.subr.mxu0 0.0
    %1066 = vmatpush1.msra.mxu0 0.0
    %1067 = vmatprep.subr.mxu0 0.0
    %1068 = vmatpush1.msra.mxu0 %v388
    %1069 = vmatprep.subr.mxu0 0.0
    %1070 = vmatpush1.msra.mxu0 %v387
    %1071 = vmatprep.subr.mxu0 0.0
    %1072 = vmatpush1.msra.mxu0 %v386
    %1073 = vmatprep.subr.mxu0 0.0
    %1074 = vmatpush1.msra.mxu0 %v385
    %1075 = vmatprep.subr.mxu0 0.0
    %1076 = vmatpush2.msra.mxu0 0.0
    %1077 = vmatprep.subr.mxu0 0.0
    %1078 = vmatpush2.msra.mxu0 0.0
    %1079 = vmatprep.subr.mxu0 0.0
    %1080 = vmatpush2.msra.mxu0 0.0
    %1081 = vmatprep.subr.mxu0 0.0
    %1082 = vmatpush2.msra.mxu0 0.0
    %1083 = vmatprep.subr.mxu0 0.0
    %1084 = vmatpush2.msra.mxu0 0.0
    %1085 = vmatprep.subr.mxu0 0.0
    %1086 = vmatpush2.msra.mxu0 0.0
    %1087 = vmatprep.subr.mxu0 0.0
    %1088 = vmatpush2.msra.mxu0 0.0
    %1089 = vmatprep.subr.mxu0 0.0
    %1090 = vmatpush2.msra.mxu0 0.0
    %1091 = vmatprep.subr.mxu0 0.0
    %1092 = vmatpush2.msra.mxu0 0.0
    %1093 = vmatprep.subr.mxu0 0.0
    %1094 = vmatpush2.msra.mxu0 0.0
    %1095 = vmatprep.subr.mxu0 0.0
    %1096 = vmatpush2.msra.mxu0 0.0
    %1097 = vmatprep.subr.mxu0 0.0
    %1098 = vmatpush2.msra.mxu0 0.0
    %1099 = vmatprep.subr.mxu0 0.0
    %1100 = vmatpush2.msra.mxu0 0.0
    %1101 = vmatprep.subr.mxu0 0.0
    %1102 = vmatpush2.msra.mxu0 0.0
    %1103 = vmatprep.subr.mxu0 0.0
    %1104 = vmatpush2.msra.mxu0 0.0
    %1105 = vmatprep.subr.mxu0 0.0
    %1106 = vmatpush2.msra.mxu0 0.0
    %1107 = vmatprep.mubr.f32.mxu0 0.0
    %1108 = vmatmul.mubr.f32.gmra.mxu0 %v1041
    %v1109 = vpop.f32.mrf.mxu0
    %v1110 = vadd.f32 0.0, %v1109
    %v1111 = vpop.f32.mrf.mxu0
    %1112 = vdwg.mxu0
    %v1114 = vrot.slane %v1110, 4
    %v1116 = vadd.f32 %v382, %v1114
    %v1117 = vxor.u32 %v1116, 2147483648
    %v1118 = vmul.f32 %v1117, 1.442695
    %v1119 = vpow.pop %v1118
    %v1120 = vadd.f32 %v1119, 1.0
    %v1121 = vrcp.pop %v1120
    %v1122 = vmul.f32 1.0, %v1121
    %v1123 = vadd.f32 %v1110, %v477
    %v1125 = vrot.slane %v1123, 4
    %1126 = vrot.lane.b32.xlu0 %v1125, 64
    %v1127 = vpop.permute.xlu0 %1126
    %v1129 = vmul.f32 %v1122, %v1127
    %1131 = vrot.lane.b32.xlu0 %v1129, 64
    %v1132 = vpop.permute.xlu0 %1131
    %v1134 = vadd.f32 %v382, %v1132
    %v1135 = vtanh.pop %v1134
    %v1136 = vsub.f32 1.0, %v1122
    %1138 = vrot.lane.b32.xlu0 %v1135, 96
    %v1139 = vpop.permute.xlu0 %1138
    %v1141 = vmul.f32 %v1136, %v1139
    %v1142 = vrot.slane %v1036, 6
    %v1144 = vmul.f32 %v1122, %v1142
    %v1145 = vadd.f32 %v1141, %v1144
    %v1147 = vrot.slane %v1145, 4
    %1148 = vrot.lane.b32.xlu0 %v1147, 96
    %v1149 = vpop.permute.xlu0 %1148
    %v1150 = vsel %vm390, %v1149, 0
    %1152 = vmatprep.subr.mxu0 0.0
    %1153 = vmatpush1.msra.mxu0 0.0
    %1154 = vmatprep.subr.mxu0 0.0
    %1155 = vmatpush1.msra.mxu0 0.0
    %1156 = vmatprep.subr.mxu0 0.0
    %1157 = vmatpush1.msra.mxu0 0.0
    %1158 = vmatprep.subr.mxu0 0.0
    %1159 = vmatpush1.msra.mxu0 0.0
    %1160 = vmatprep.subr.mxu0 0.0
    %1161 = vmatpush1.msra.mxu0 0.0
    %1162 = vmatprep.subr.mxu0 0.0
    %1163 = vmatpush1.msra.mxu0 0.0
    %1164 = vmatprep.subr.mxu0 0.0
    %1165 = vmatpush1.msra.mxu0 0.0
    %1166 = vmatprep.subr.mxu0 0.0
    %1167 = vmatpush1.msra.mxu0 0.0
    %1168 = vmatprep.subr.mxu0 0.0
    %1169 = vmatpush1.msra.mxu0 0.0
    %1170 = vmatprep.subr.mxu0 0.0
    %1171 = vmatpush1.msra.mxu0 0.0
    %1172 = vmatprep.subr.mxu0 0.0
    %1173 = vmatpush1.msra.mxu0 0.0
    %1174 = vmatprep.subr.mxu0 0.0
    %1175 = vmatpush1.msra.mxu0 0.0
    %1176 = vmatprep.subr.mxu0 0.0
    %1177 = vmatpush1.msra.mxu0 %v388
    %1178 = vmatprep.subr.mxu0 0.0
    %1179 = vmatpush1.msra.mxu0 %v387
    %1180 = vmatprep.subr.mxu0 0.0
    %1181 = vmatpush1.msra.mxu0 %v386
    %1182 = vmatprep.subr.mxu0 0.0
    %1183 = vmatpush1.msra.mxu0 %v385
    %1184 = vmatprep.subr.mxu0 0.0
    %1185 = vmatpush2.msra.mxu0 0.0
    %1186 = vmatprep.subr.mxu0 0.0
    %1187 = vmatpush2.msra.mxu0 0.0
    %1188 = vmatprep.subr.mxu0 0.0
    %1189 = vmatpush2.msra.mxu0 0.0
    %1190 = vmatprep.subr.mxu0 0.0
    %1191 = vmatpush2.msra.mxu0 0.0
    %1192 = vmatprep.subr.mxu0 0.0
    %1193 = vmatpush2.msra.mxu0 0.0
    %1194 = vmatprep.subr.mxu0 0.0
    %1195 = vmatpush2.msra.mxu0 0.0
    %1196 = vmatprep.subr.mxu0 0.0
    %1197 = vmatpush2.msra.mxu0 0.0
    %1198 = vmatprep.subr.mxu0 0.0
    %1199 = vmatpush2.msra.mxu0 0.0
    %1200 = vmatprep.subr.mxu0 0.0
    %1201 = vmatpush2.msra.mxu0 0.0
    %1202 = vmatprep.subr.mxu0 0.0
    %1203 = vmatpush2.msra.mxu0 0.0
    %1204 = vmatprep.subr.mxu0 0.0
    %1205 = vmatpush2.msra.mxu0 0.0
    %1206 = vmatprep.subr.mxu0 0.0
    %1207 = vmatpush2.msra.mxu0 0.0
    %1208 = vmatprep.subr.mxu0 0.0
    %1209 = vmatpush2.msra.mxu0 0.0
    %1210 = vmatprep.subr.mxu0 0.0
    %1211 = vmatpush2.msra.mxu0 0.0
    %1212 = vmatprep.subr.mxu0 0.0
    %1213 = vmatpush2.msra.mxu0 0.0
    %1214 = vmatprep.subr.mxu0 0.0
    %1215 = vmatpush2.msra.mxu0 0.0
    %1216 = vmatprep.mubr.f32.mxu0 0.0
    %1217 = vmatmul.mubr.f32.gmra.mxu0 %v1150
    %v1218 = vpop.f32.mrf.mxu0
    %v1219 = vadd.f32 0.0, %v1218
    %v1220 = vpop.f32.mrf.mxu0
    %1221 = vdwg.mxu0
    %v1223 = vrot.slane %v1219, 2
    %v1225 = vadd.f32 %v382, %v1223
    %v1226 = vxor.u32 %v1225, 2147483648
    %v1227 = vmul.f32 %v1226, 1.442695
    %v1228 = vpow.pop %v1227
    %v1229 = vadd.f32 %v1228, 1.0
    %v1230 = vrcp.pop %v1229
    %v1231 = vmul.f32 1.0, %v1230
    %v1232 = vadd.f32 %v1219, %v477
    %v1234 = vrot.slane %v1232, 2
    %1235 = vrot.lane.b32.xlu0 %v1234, 64
    %v1236 = vpop.permute.xlu0 %1235
    %v1238 = vmul.f32 %v1231, %v1236
    %1240 = vrot.lane.b32.xlu0 %v1238, 64
    %v1241 = vpop.permute.xlu0 %1240
    %v1243 = vadd.f32 %v382, %v1241
    %v1244 = vtanh.pop %v1243
    %v1245 = vsub.f32 1.0, %v1231
    %1247 = vrot.lane.b32.xlu0 %v1244, 96
    %v1248 = vpop.permute.xlu0 %1247
    %v1250 = vmul.f32 %v1245, %v1248
    %v1251 = vrot.slane %v1145, 6
    %v1253 = vmul.f32 %v1231, %v1251
    %v1254 = vadd.f32 %v1250, %v1253
    %1256 = vrot.lane.b32.xlu0 %v1254, 96
    %v1257 = vpop.permute.xlu0 %1256
    %vm1259 = vcmask 261126
    %1260 = vst.msk [vmem:[#allocation2 - $0x6] sm:$0xc0] %vm1259, %v1257
    // Predicated region
    $region34: #{utterances_and_block_region_counters_encode.1} parent=1 // pred_check
      _
    $region35: #{utterances_and_block_region_counters_encode.1} parent=1 // pred_check_branch
      %1262 = sbr.rel (0) target = $region37
    $region36: #{utterances_and_block_region_counters_encode.1} parent=1 // pred_region
      _
    $region37: #{utterances_and_block_region_counters_encode.1} parent=1 // pred_fallthru
      _
    // Predicated region
    $region38: #{utterances_and_block_region_counters_encode.1} parent=1 // pred_check
      _
    $region39: #{utterances_and_block_region_counters_encode.1} parent=1 // pred_check_branch
      %1264 = sbr.rel (0) target = $region41
    $region40: #{utterances_and_block_region_counters_encode.1} parent=1 // pred_region
      %s1266 = ssub.s32 32, 32
      %1267 = vsyncadd [#allocation3], %s1266
      %s1269 = sshll.u32 [#allocation2], 4
      %s1270 = int_to_ptr.vmem [resolvable:$true] %s1269
      %1272 = dma.vmem_to_hbm [thread:$0]  %s1270, 32, %s9, [#allocation3]
    $region41: #{utterances_and_block_region_counters_encode.1} parent=1 // pred_fallthru
      _
    // Predicated region
    $region42: #{utterances_and_block_region_counters_encode.1} parent=1 // pred_check
      _
    $region43: #{utterances_and_block_region_counters_encode.1} parent=1 // pred_check_branch
      %1274 = sbr.rel (0) target = $region45
    $region44: #{utterances_and_block_region_counters_encode.1} parent=1 // pred_region
      _
    $region45: #{utterances_and_block_region_counters_encode.1} parent=1 // pred_fallthru
      _
    // Predicated region
    $region46: #{utterances_and_block_region_counters_encode.1} parent=1 // pred_check
      _
    $region47: #{utterances_and_block_region_counters_encode.1} parent=1 // pred_check_branch
      %1276 = sbr.rel (0) target = $region49
    $region48: #{utterances_and_block_region_counters_encode.1} parent=1 // pred_region
      %1277 = dma.done [#allocation3], 32
    $region49: #{utterances_and_block_region_counters_encode.1} parent=1 // pred_fallthru
      _
    %1278 = vsyncpa [#allocation3], 1

</llo_original>
